<compile_context>
chip_gen: v7x
topology: tpu7x:2x2x1
jax: 0.10.0
libtpu: 0.0.40
codegen_flags: <defaults>
</compile_context>

<pallas_src>
import functools

import jax
import jax.numpy as jnp
from jax.experimental import pallas as pl
from jax.experimental.pallas import tpu as pltpu


def _round_up(v: int, m: int) -> int:
    return (v + m - 1) // m * m


def _use_bf16_tanh() -> bool:
    """bf16 VPU/EUP exists on v6e/v7x; v5e (and older) must stay f32."""
    try:
        kind = jax.devices()[0].device_kind.lower()
    except Exception:
        return False
    return any(tag in kind for tag in ("v6", "v7", "7x"))


def _ode_fixed_step_kernel(x_ref, w1_ref, b1_ref, w2_ref, b2_ref, o_ref, *,
                           dt, n_steps, method, bf16_tanh):
    """Fixed-step integration of y' = tanh(y@W1+b1)@W2+b2 on one (TILE_N, Dp) tile."""
    # Weights arrive already in bf16 (MXU fast path, f32 accumulation).
    w1 = w1_ref[...]
    w2 = w2_ref[...]
    # Biases stay as single-sublane (1, H)/(1, D) f32 vregs; the adds below
    # broadcast along sublanes -- no full-tile materialization.
    b1 = b1_ref[...]
    b2 = b2_ref[...]

    half_dt = 0.5 * dt
    dt6 = dt / 6.0

    def odefunc(y):
        # Two MXU matmuls per stage; y/k accumulation stays f32.
        z = jnp.dot(y.astype(jnp.bfloat16), w1,
                    preferred_element_type=jnp.float32) + b1
        if bf16_tanh:
            # v6e/v7x: tanh on packed bf16 vregs (EUP bf16 path), feeds the
            # MXU directly with no extra cast.
            h = jnp.tanh(z.astype(jnp.bfloat16))
        else:
            # v5e: no bf16 EUP -- tanh in f32, cast only for the matmul.
            h = jnp.tanh(z).astype(jnp.bfloat16)
        return jnp.dot(h, w2, preferred_element_type=jnp.float32) + b2

    if method == "euler":
        def step(_, y):
            return y + dt * odefunc(y)
    else:  # rk4 (and dopri5/adams fallback)
        def step(_, y):
            # Running-accumulator RK4: keeps ~4 tile-sized arrays live.
            k1 = odefunc(y)
            acc = k1
            k2 = odefunc(y + half_dt * k1)
            acc = acc + 2.0 * k2
            k3 = odefunc(y + half_dt * k2)
            acc = acc + 2.0 * k3
            k4 = odefunc(y + dt * k3)
            return y + dt6 * (acc + k4)

    y0 = x_ref[...].astype(jnp.float32)
    # Steps are strictly serially dependent; unrolling only inflates live
    # ranges, so keep vreg pressure at one step's worth.
    yT = jax.lax.fori_loop(0, n_steps, step, y0, unroll=1)
    o_ref[...] = yT.astype(o_ref.dtype)


class ODEBlock:
    """JAX/Pallas equivalent of torchgde ODEBlock with a synthetic MLP odefunc."""

    _VALID_METHODS = ("euler", "rk4", "dopri5", "adams")

    def __init__(self, w1, b1, w2, b2, method="rk4", rtol=1e-3, atol=1e-4,
                 adjoint=True, n_steps=1):
        # rtol/atol/adjoint kept for interface parity; they do not change the
        # forward value of a fixed-step solver.
        if method not in self._VALID_METHODS:
            raise ValueError(f"method must be one of {self._VALID_METHODS}, got {method!r}")
        self.w1, self.b1, self.w2, self.b2 = w1, b1, w2, b2
        self.method = method
        self.rtol, self.atol = rtol, atol
        self.adjoint_flag = adjoint
        self.n_steps = int(n_steps)

    def forward(self, x, T: int = 1):
        dt = float(T) / float(self.n_steps)
        N, D = x.shape
        H = self.w1.shape[1]

        # Effective solver: euler stays euler; everything else runs fixed-step
        # RK4 (dopri5/adams have no adaptive equivalent here).
        eff_method = "euler" if self.method == "euler" else "rk4"

        # Lane-dense padding: last dims to multiples of 128 so matmuls and the
        # output store are full-lane ops.  Padding rows/cols are exactly zero,
        # so padded lanes stay zero through tanh(0)=0 and are sliced off below.
        d_pad = max(_round_up(D, 128), 128)
        h_pad = max(_round_up(H, 128), 128)

        # 128-row tiles: 16 vregs per live f32 array (fits the 64-entry vreg
        # file with the accumulator-style RK4), and >= 2 tiles per TC on v7x.
        tile_n = 128 if N >= 128 else _round_up(N, 8)
        n_pad = _round_up(N, tile_n)

        f32 = jnp.float32
        bf16 = jnp.bfloat16
        x_p = jnp.zeros((n_pad, d_pad), x.dtype).at[:N, :D].set(x)
        # Weights already in bf16 (halves DMA + resident footprint); biases f32.
        w1_p = jnp.zeros((d_pad, h_pad), bf16).at[:D, :H].set(self.w1.astype(bf16))
        w2_p = jnp.zeros((h_pad, d_pad), bf16).at[:H, :D].set(self.w2.astype(bf16))
        b1_p = jnp.zeros((1, h_pad), f32).at[:, :H].set(self.b1.astype(f32).reshape(1, H))
        b2_p = jnp.zeros((1, d_pad), f32).at[:, :D].set(self.b2.astype(f32).reshape(1, D))

        kernel = functools.partial(
            _ode_fixed_step_kernel,
            dt=dt,
            n_steps=self.n_steps,
            method=eff_method,
            bf16_tanh=_use_bf16_tanh(),
        )

        out_p = pl.pallas_call(
            kernel,
            out_shape=jax.ShapeDtypeStruct((n_pad, d_pad), x.dtype),
            grid=(n_pad // tile_n,),
            in_specs=[
                pl.BlockSpec((tile_n, d_pad), lambda i: (i, 0)),  # x tile
                pl.BlockSpec((d_pad, h_pad), lambda i: (0, 0)),   # W1 (resident, bf16)
                pl.BlockSpec((1, h_pad), lambda i: (0, 0)),       # b1 (f32)
                pl.BlockSpec((h_pad, d_pad), lambda i: (0, 0)),   # W2 (resident, bf16)
                pl.BlockSpec((1, d_pad), lambda i: (0, 0)),       # b2 (f32)
            ],
            out_specs=pl.BlockSpec((tile_n, d_pad), lambda i: (i, 0)),
            compiler_params=pltpu.CompilerParams(
                # Row tiles are independent -> shard across TCs on v7x.
                dimension_semantics=("parallel",),
                # Safe against v7x's 64 MiB physical / 32 MiB scoped VMEM
                # (actual live footprint is ~1 MiB; this is just a ceiling).
                vmem_limit_bytes=32 << 20,
            ),
        )(x_p, w1_p, b1_p, w2_p, b2_p)

        # Strip lane/row padding back to the caller's shape.
        return out_p[:N, :D]

    __call__ = forward


def _reference_forward(x, w1, b1, w2, b2, T=1, n_steps=1, method="rk4"):
    """Pure-JAX f32 reference (same fixed-step solver) for correctness checking."""
    dt = float(T) / float(n_steps)

    def f(y):
        return jnp.tanh(y @ w1 + b1) @ w2 + b2

    y = x.astype(jnp.float32)
    for _ in range(n_steps):
        if method == "euler":
            y = y + dt * f(y)
        else:
            k1 = f(y)
            k2 = f(y + 0.5 * dt * k1)
            k3 = f(y + 0.5 * dt * k2)
            k4 = f(y + dt * k3)
            y = y + (dt / 6.0) * (k1 + 2.0 * k2 + 2.0 * k3 + k4)
    return y.astype(x.dtype)


if __name__ == "__main__":
    # Batched node features: 8 stacked graphs x 64 nodes = 512 rows, D=32
    # features, H=64 hidden units (padded to 128 lanes inside forward()).
    N, D, H = 512, 32, 64
    key = jax.random.PRNGKey(0)
    kx, k1, k2 = jax.random.split(key, 3)

    x = jax.random.normal(kx, (N, D), dtype=jnp.float32)

    # Deterministic synthetic odefunc parameters (scaled for a mild vector field).
    w1 = 0.1 * jax.random.normal(k1, (D, H), dtype=jnp.float32)
    b1 = jnp.zeros((1, H), dtype=jnp.float32)
    w2 = 0.1 * jax.random.normal(k2, (H, D), dtype=jnp.float32)
    b2 = jnp.zeros((1, D), dtype=jnp.float32)

    block = ODEBlock(w1, b1, w2, b2, method="rk4", adjoint=True, n_steps=4)

    out = block(x, T=1)
    out = jax.block_until_ready(out)

    ref = _reference_forward(x, w1, b1, w2, b2, T=1, n_steps=4, method="rk4")
    assert out.shape == x.shape and out.dtype == x.dtype
    # bf16 matmul operands (and bf16 tanh on v6e/v7x) with f32 accumulation ->
    # loosened tolerance vs the f32 reference.  Re-validate for long
    # integrations (rounding compounds with n_steps).
    assert jnp.allclose(out, ref, rtol=5e-2, atol=5e-2), "mismatch vs reference"

    print("KERNEL_OK")
</pallas_src>

<mosaic_0001>
module attributes {stable_mosaic.version = 11 : i64} {
  func.func @_ode_fixed_step_kernel(%arg0: i32, %arg1: memref<128x128xf32, #tpu.memory_space<vmem>>, %arg2: memref<128x128xbf16, #tpu.memory_space<vmem>>, %arg3: memref<1x128xf32, #tpu.memory_space<vmem>>, %arg4: memref<128x128xbf16, #tpu.memory_space<vmem>>, %arg5: memref<1x128xf32, #tpu.memory_space<vmem>>, %arg6: memref<128x128xf32, #tpu.memory_space<vmem>>) attributes {dimension_semantics = [#tpu.dimension_semantics<parallel>], iteration_bounds = array<i64: 4>, scalar_prefetch = 0 : i64, scratch_operands = 0 : i64, tpu.core_type = #tpu.core_type<tc>, window_params = [{transform_indices = @transform_0, window_bounds = array<i64: 128, 128>}, {pipeline_mode = #tpu.pipeline_mode<synchronous>, transform_indices = @transform_1, window_bounds = array<i64: 128, 128>}, {pipeline_mode = #tpu.pipeline_mode<synchronous>, transform_indices = @transform_2, window_bounds = array<i64: 1, 128>}, {pipeline_mode = #tpu.pipeline_mode<synchronous>, transform_indices = @transform_3, window_bounds = array<i64: 128, 128>}, {pipeline_mode = #tpu.pipeline_mode<synchronous>, transform_indices = @transform_4, window_bounds = array<i64: 1, 128>}, {transform_indices = @transform_5, window_bounds = array<i64: 128, 128>}]} {
    %c0 = arith.constant 0 : index
    %c0_0 = arith.constant 0 : index
    %0 = vector.load %arg2[%c0, %c0_0] : memref<128x128xbf16, #tpu.memory_space<vmem>>, vector<128x128xbf16>
    %c0_1 = arith.constant 0 : index
    %c0_2 = arith.constant 0 : index
    %1 = vector.load %arg4[%c0_1, %c0_2] : memref<128x128xbf16, #tpu.memory_space<vmem>>, vector<128x128xbf16>
    %c0_3 = arith.constant 0 : index
    %c0_4 = arith.constant 0 : index
    %2 = vector.load %arg3[%c0_3, %c0_4] : memref<1x128xf32, #tpu.memory_space<vmem>>, vector<1x128xf32>
    %c0_5 = arith.constant 0 : index
    %c0_6 = arith.constant 0 : index
    %3 = vector.load %arg5[%c0_5, %c0_6] : memref<1x128xf32, #tpu.memory_space<vmem>>, vector<1x128xf32>
    %c0_7 = arith.constant 0 : index
    %c0_8 = arith.constant 0 : index
    %4 = vector.load %arg1[%c0_7, %c0_8] : memref<128x128xf32, #tpu.memory_space<vmem>>, vector<128x128xf32>
    %c0_i32 = arith.constant 0 : i32
    %c4_i32 = arith.constant 4 : i32
    %5 = arith.addi %c0_i32, %c4_i32 : i32
    %c1_i32 = arith.constant 1 : i32
    %6 = scf.for %arg7 = %c0_i32 to %5 step %c1_i32 iter_args(%arg8 = %4) -> (vector<128x128xf32>)  : i32 {
      %8 = arith.truncf %arg8 : vector<128x128xf32> to vector<128x128xbf16>
      %cst = arith.constant dense<0.000000e+00> : vector<128x128xf32>
      %9 = tpu.matmul %8, %0, %cst {dimension_numbers = #tpu.dot_dimension_numbers<[1], [0], [0], [1], [0, 0, 1, 1], [], []>} : vector<128x128xbf16>, vector<128x128xbf16>, vector<128x128xf32> -> vector<128x128xf32>
      %10 = vector.broadcast %2 : vector<1x128xf32> to vector<128x128xf32>
      %11 = arith.addf %9, %10 : vector<128x128xf32>
      %12 = math.tanh %11 : vector<128x128xf32>
      %13 = arith.truncf %12 : vector<128x128xf32> to vector<128x128xbf16>
      %cst_11 = arith.constant dense<0.000000e+00> : vector<128x128xf32>
      %14 = tpu.matmul %13, %1, %cst_11 {dimension_numbers = #tpu.dot_dimension_numbers<[1], [0], [0], [1], [0, 0, 1, 1], [], []>} : vector<128x128xbf16>, vector<128x128xbf16>, vector<128x128xf32> -> vector<128x128xf32>
      %15 = vector.broadcast %3 : vector<1x128xf32> to vector<128x128xf32>
      %16 = arith.addf %14, %15 : vector<128x128xf32>
      %cst_12 = arith.constant 1.250000e-01 : f32
      %17 = vector.broadcast %cst_12 : f32 to vector<128x128xf32>
      %18 = arith.mulf %17, %16 : vector<128x128xf32>
      %19 = arith.addf %arg8, %18 : vector<128x128xf32>
      %20 = arith.truncf %19 : vector<128x128xf32> to vector<128x128xbf16>
      %cst_13 = arith.constant dense<0.000000e+00> : vector<128x128xf32>
      %21 = tpu.matmul %20, %0, %cst_13 {dimension_numbers = #tpu.dot_dimension_numbers<[1], [0], [0], [1], [0, 0, 1, 1], [], []>} : vector<128x128xbf16>, vector<128x128xbf16>, vector<128x128xf32> -> vector<128x128xf32>
      %22 = vector.broadcast %2 : vector<1x128xf32> to vector<128x128xf32>
      %23 = arith.addf %21, %22 : vector<128x128xf32>
      %24 = math.tanh %23 : vector<128x128xf32>
      %25 = arith.truncf %24 : vector<128x128xf32> to vector<128x128xbf16>
      %cst_14 = arith.constant dense<0.000000e+00> : vector<128x128xf32>
      %26 = tpu.matmul %25, %1, %cst_14 {dimension_numbers = #tpu.dot_dimension_numbers<[1], [0], [0], [1], [0, 0, 1, 1], [], []>} : vector<128x128xbf16>, vector<128x128xbf16>, vector<128x128xf32> -> vector<128x128xf32>
      %27 = vector.broadcast %3 : vector<1x128xf32> to vector<128x128xf32>
      %28 = arith.addf %26, %27 : vector<128x128xf32>
      %cst_15 = arith.constant 2.000000e+00 : f32
      %29 = vector.broadcast %cst_15 : f32 to vector<128x128xf32>
      %30 = arith.mulf %29, %28 : vector<128x128xf32>
      %31 = arith.addf %16, %30 : vector<128x128xf32>
      %cst_16 = arith.constant 1.250000e-01 : f32
      %32 = vector.broadcast %cst_16 : f32 to vector<128x128xf32>
      %33 = arith.mulf %32, %28 : vector<128x128xf32>
      %34 = arith.addf %arg8, %33 : vector<128x128xf32>
      %35 = arith.truncf %34 : vector<128x128xf32> to vector<128x128xbf16>
      %cst_17 = arith.constant dense<0.000000e+00> : vector<128x128xf32>
      %36 = tpu.matmul %35, %0, %cst_17 {dimension_numbers = #tpu.dot_dimension_numbers<[1], [0], [0], [1], [0, 0, 1, 1], [], []>} : vector<128x128xbf16>, vector<128x128xbf16>, vector<128x128xf32> -> vector<128x128xf32>
      %37 = vector.broadcast %2 : vector<1x128xf32> to vector<128x128xf32>
      %38 = arith.addf %36, %37 : vector<128x128xf32>
      %39 = math.tanh %38 : vector<128x128xf32>
      %40 = arith.truncf %39 : vector<128x128xf32> to vector<128x128xbf16>
      %cst_18 = arith.constant dense<0.000000e+00> : vector<128x128xf32>
      %41 = tpu.matmul %40, %1, %cst_18 {dimension_numbers = #tpu.dot_dimension_numbers<[1], [0], [0], [1], [0, 0, 1, 1], [], []>} : vector<128x128xbf16>, vector<128x128xbf16>, vector<128x128xf32> -> vector<128x128xf32>
      %42 = vector.broadcast %3 : vector<1x128xf32> to vector<128x128xf32>
      %43 = arith.addf %41, %42 : vector<128x128xf32>
      %cst_19 = arith.constant 2.000000e+00 : f32
      %44 = vector.broadcast %cst_19 : f32 to vector<128x128xf32>
      %45 = arith.mulf %44, %43 : vector<128x128xf32>
      %46 = arith.addf %31, %45 : vector<128x128xf32>
      %cst_20 = arith.constant 2.500000e-01 : f32
      %47 = vector.broadcast %cst_20 : f32 to vector<128x128xf32>
      %48 = arith.mulf %47, %43 : vector<128x128xf32>
      %49 = arith.addf %arg8, %48 : vector<128x128xf32>
      %50 = arith.truncf %49 : vector<128x128xf32> to vector<128x128xbf16>
      %cst_21 = arith.constant dense<0.000000e+00> : vector<128x128xf32>
      %51 = tpu.matmul %50, %0, %cst_21 {dimension_numbers = #tpu.dot_dimension_numbers<[1], [0], [0], [1], [0, 0, 1, 1], [], []>} : vector<128x128xbf16>, vector<128x128xbf16>, vector<128x128xf32> -> vector<128x128xf32>
      %52 = vector.broadcast %2 : vector<1x128xf32> to vector<128x128xf32>
      %53 = arith.addf %51, %52 : vector<128x128xf32>
      %54 = math.tanh %53 : vector<128x128xf32>
      %55 = arith.truncf %54 : vector<128x128xf32> to vector<128x128xbf16>
      %cst_22 = arith.constant dense<0.000000e+00> : vector<128x128xf32>
      %56 = tpu.matmul %55, %1, %cst_22 {dimension_numbers = #tpu.dot_dimension_numbers<[1], [0], [0], [1], [0, 0, 1, 1], [], []>} : vector<128x128xbf16>, vector<128x128xbf16>, vector<128x128xf32> -> vector<128x128xf32>
      %57 = vector.broadcast %3 : vector<1x128xf32> to vector<128x128xf32>
      %58 = arith.addf %56, %57 : vector<128x128xf32>
      %59 = arith.addf %46, %58 : vector<128x128xf32>
      %cst_23 = arith.constant 0.0416666679 : f32
      %60 = vector.broadcast %cst_23 : f32 to vector<128x128xf32>
      %61 = arith.mulf %60, %59 : vector<128x128xf32>
      %62 = arith.addf %arg8, %61 : vector<128x128xf32>
      scf.yield %62 : vector<128x128xf32>
    }
    %c0_9 = arith.constant 0 : index
    %c0_10 = arith.constant 0 : index
    %7 = vector.load %arg6[%c0_9, %c0_10] : memref<128x128xf32, #tpu.memory_space<vmem>>, vector<128x128xf32>
    tpu.vector_store %arg6[%c0_9, %c0_10], %6 {strides = array<i32>} : memref<128x128xf32, #tpu.memory_space<vmem>>, vector<128x128xf32>,
    return
  }
  func.func @transform_0(%arg0: i32) -> (i32, i32) {
    %c0_i32 = arith.constant 0 : i32
    %c0_i32_0 = arith.constant 0 : i32
    return %arg0, %c0_i32 : i32, i32
  }
  func.func @transform_1(%arg0: i32) -> (i32, i32) {
    %c0_i32 = arith.constant 0 : i32
    %c0_i32_0 = arith.constant 0 : i32
    %c0_i32_1 = arith.constant 0 : i32
    return %c0_i32, %c0_i32_0 : i32, i32
  }
  func.func @transform_2(%arg0: i32) -> (i32, i32) {
    %c0_i32 = arith.constant 0 : i32
    %c0_i32_0 = arith.constant 0 : i32
    %c0_i32_1 = arith.constant 0 : i32
    return %c0_i32, %c0_i32_0 : i32, i32
  }
  func.func @transform_3(%arg0: i32) -> (i32, i32) {
    %c0_i32 = arith.constant 0 : i32
    %c0_i32_0 = arith.constant 0 : i32
    %c0_i32_1 = arith.constant 0 : i32
    return %c0_i32, %c0_i32_0 : i32, i32
  }
  func.func @transform_4(%arg0: i32) -> (i32, i32) {
    %c0_i32 = arith.constant 0 : i32
    %c0_i32_0 = arith.constant 0 : i32
    %c0_i32_1 = arith.constant 0 : i32
    return %c0_i32, %c0_i32_0 : i32, i32
  }
  func.func @transform_5(%arg0: i32) -> (i32, i32) {
    %c0_i32 = arith.constant 0 : i32
    %c0_i32_0 = arith.constant 0 : i32
    return %arg0, %c0_i32 : i32, i32
  }
}

</mosaic_0001>

<llo_original>
// kernel: tpu_custom_call.1
$region0: #{tpu_custom_call.1}
  #allocation0 [shape = 'u32[]', space=smem, size = 0x4, offset = 0x4, fixed_abs, tag = 'smem constant byte address 0x4 - core index']
  #allocation1 [shape = 'u32[144,128]{1,0:T(1,128)}', space=vmem, size = 0x12000, scoped, tag = 'internal scratch']
  %s0 = inlined_call_operand.hbm [shape: f32[512,128], index: 0, kind: input, shape index: {}]
  %s1 = inlined_call_operand.hbm [shape: bf16[128,128], index: 1, kind: input, shape index: {}]
  %s2 = inlined_call_operand.vmem [shape: f32[1,128], index: 2, kind: input, shape index: {}]
  %s3 = inlined_call_operand.hbm [shape: bf16[128,128], index: 3, kind: input, shape index: {}]
  %s4 = inlined_call_operand.vmem [shape: f32[1,128], index: 4, kind: input, shape index: {}]
  %s5 = inlined_call_operand.hbm [shape: f32[512,128], index: 5, kind: output, shape index: {}]
  %s6 = sld [smem:[#allocation0]]
  $region72: #{tpu_custom_call.1} parent=0
    _
  %s8 = ssub.s32 1, %s6
  %s9 = scalar_select 0, %s8, %s6
  $region1: #{tpu_custom_call.1} parent=0
    #allocation2 [shape = 'u8[131072]{0}', space=vmem, size = 0x20000, scoped, tag = 'input window, operand 0']
    #allocation3 [shape = 's32[2]{0}', space=sflag, size = 0x8, scoped, tag = 'scoped memory for tpu_custom_call.1']
    #allocation4 [shape = 's32[2]{0}', space=sflag, size = 0x8, scoped, tag = 'scoped memory for tpu_custom_call.1']
    #allocation5 [shape = 'u8[32768]{0}', space=vmem, size = 0x8000, scoped, tag = 'input window, operand 1, single buffered']
    #allocation6 [shape = 's32[1]{0}', space=sflag, size = 0x4, scoped, tag = 'scoped memory for tpu_custom_call.1']
    #allocation7 [shape = 'u8[32768]{0}', space=vmem, size = 0x8000, scoped, tag = 'input window, operand 3, single buffered']
    #allocation8 [shape = 'u8[131072]{0}', space=vmem, size = 0x20000, scoped, tag = 'output window, operand 0']
    %10 = vsyncpa [#allocation3], 0
    %s11 = scalar_lea.sflag [#allocation3], 1
    %12 = vsyncpa %s11, 0
    %13 = vsyncpa [#allocation6], 0
    %14 = vsyncpa [#allocation4], 0
    %s15 = scalar_lea.sflag [#allocation4], 1
    %16 = vsyncpa %s15, 0
    loop: start=0, step=1, limit=6
    $region2: #{tpu_custom_call.1} parent=1 // loop_pre_header
      _
    $region3: #{tpu_custom_call.1} parent=1 // loop_header
      %s18 = sphi 0, %s22
      %p19 = scmp.ge.s32.totalorder %s18, 6
      %s28 = sphi 0, %s30
      %s31 = sphi 0, %s28
      %s32 = sphi 0, %s31
      %s48 = sphi 0, %s32
      %s52 = sphi 0, %s52
      %s54 = sphi 0, %s52
      %s55 = sphi 0, %s54
      %s69 = sphi 0, %s55
      %s73 = sphi 0, %s73
      %s75 = sphi 0, %s73
      %s76 = sphi 0, %s75
      %s90 = sphi 0, %s76
      %s94 = sphi 0, %s94
      %s96 = sphi 0, %s94
      %s97 = sphi 0, %s96
      %s111 = sphi 0, %s97
      %s115 = sphi 0, %s115
      %s117 = sphi 0, %s115
      %s118 = sphi 0, %s117
      %s132 = sphi 0, %s118
      %s138 = sphi 0, %s140
      %s141 = sphi 0, %s138
      %s142 = sphi 0, %s141
      %s158 = sphi 0, %s142
    $region4: #{tpu_custom_call.1} parent=1 // loop_header_branch
      %21 = sbr.rel (%p19) target = $region8
    $region5: #{tpu_custom_call.1} parent=1 // loop_body
      %s23 = ssub.s32 %s18, 1
      %s24 = ssub.s32 %s18, 2
      %s25 = sadd.s32 %s18, 1
      %s26 = ssub.s32 %s18, %s25
      %p27 = scmp.eq.s32.totalorder %s26, 0
      %s29 = sadd.s32 %s28, 1
      %s30 = scalar_select %p27, %s28, %s29
      %p33 = pneg %p27
      %p34 = scmp.eq.s32.totalorder %s18, 3
      %p35 = por %p33, %p34
      %p36 = scmp.ne.s32.totalorder %s28, %s31
      %p37 = scmp.eq.s32.totalorder %s18, 0
      %p38 = por %p36, %p37
      %p39 = scmp.ne.s32.totalorder %s28, %s31
      %p40 = scmp.eq.s32.totalorder %s23, 3
      %p41 = por %p39, %p40
      %p42 = scmp.ne.s32.totalorder %s31, %s32
      %p43 = scmp.eq.s32.totalorder %s23, 0
      %p44 = por %p42, %p43
      %p45 = scmp.ne.s32.totalorder %s31, %s32
      %p46 = scmp.eq.s32.totalorder %s24, 3
      %p47 = por %p45, %p46
      %p49 = scmp.ne.s32.totalorder %s32, %s48
      %p50 = scmp.eq.s32.totalorder %s24, 0
      %p51 = por %p49, %p50
      %s53 = sadd.s32 %s52, 1
      %p56 = scmp.eq.s32.totalorder %s18, 3
      %p57 = scmp.ne.s32.totalorder %s52, %s54
      %p58 = scmp.eq.s32.totalorder %s18, 0
      %p59 = por %p57, %p58
      %p60 = scmp.ne.s32.totalorder %s52, %s54
      %p61 = scmp.eq.s32.totalorder %s23, 3
      %p62 = por %p60, %p61
      %p63 = scmp.ne.s32.totalorder %s54, %s55
      %p64 = scmp.eq.s32.totalorder %s23, 0
      %p65 = por %p63, %p64
      %p66 = scmp.ne.s32.totalorder %s54, %s55
      %p67 = scmp.eq.s32.totalorder %s24, 3
      %p68 = por %p66, %p67
      %p70 = scmp.ne.s32.totalorder %s55, %s69
      %p71 = scmp.eq.s32.totalorder %s24, 0
      %p72 = por %p70, %p71
      %s74 = sadd.s32 %s73, 1
      %p77 = scmp.eq.s32.totalorder %s18, 3
      %p78 = scmp.ne.s32.totalorder %s73, %s75
      %p79 = scmp.eq.s32.totalorder %s18, 0
      %p80 = por %p78, %p79
      %p81 = scmp.ne.s32.totalorder %s73, %s75
      %p82 = scmp.eq.s32.totalorder %s23, 3
      %p83 = por %p81, %p82
      %p84 = scmp.ne.s32.totalorder %s75, %s76
      %p85 = scmp.eq.s32.totalorder %s23, 0
      %p86 = por %p84, %p85
      %p87 = scmp.ne.s32.totalorder %s75, %s76
      %p88 = scmp.eq.s32.totalorder %s24, 3
      %p89 = por %p87, %p88
      %p91 = scmp.ne.s32.totalorder %s76, %s90
      %p92 = scmp.eq.s32.totalorder %s24, 0
      %p93 = por %p91, %p92
      %s95 = sadd.s32 %s94, 1
      %p98 = scmp.eq.s32.totalorder %s18, 3
      %p99 = scmp.ne.s32.totalorder %s94, %s96
      %p100 = scmp.eq.s32.totalorder %s18, 0
      %p101 = por %p99, %p100
      %p102 = scmp.ne.s32.totalorder %s94, %s96
      %p103 = scmp.eq.s32.totalorder %s23, 3
      %p104 = por %p102, %p103
      %p105 = scmp.ne.s32.totalorder %s96, %s97
      %p106 = scmp.eq.s32.totalorder %s23, 0
      %p107 = por %p105, %p106
      %p108 = scmp.ne.s32.totalorder %s96, %s97
      %p109 = scmp.eq.s32.totalorder %s24, 3
      %p110 = por %p108, %p109
      %p112 = scmp.ne.s32.totalorder %s97, %s111
      %p113 = scmp.eq.s32.totalorder %s24, 0
      %p114 = por %p112, %p113
      %s116 = sadd.s32 %s115, 1
      %p119 = scmp.eq.s32.totalorder %s18, 3
      %p120 = scmp.ne.s32.totalorder %s115, %s117
      %p121 = scmp.eq.s32.totalorder %s18, 0
      %p122 = por %p120, %p121
      %p123 = scmp.ne.s32.totalorder %s115, %s117
      %p124 = scmp.eq.s32.totalorder %s23, 3
      %p125 = por %p123, %p124
      %p126 = scmp.ne.s32.totalorder %s117, %s118
      %p127 = scmp.eq.s32.totalorder %s23, 0
      %p128 = por %p126, %p127
      %p129 = scmp.ne.s32.totalorder %s117, %s118
      %p130 = scmp.eq.s32.totalorder %s24, 3
      %p131 = por %p129, %p130
      %p133 = scmp.ne.s32.totalorder %s118, %s132
      %p134 = scmp.eq.s32.totalorder %s24, 0
      %p135 = por %p133, %p134
      %s136 = ssub.s32 %s18, %s25
      %p137 = scmp.eq.s32.totalorder %s136, 0
      %s139 = sadd.s32 %s138, 1
      %s140 = scalar_select %p137, %s138, %s139
      %p143 = pneg %p137
      %p144 = scmp.eq.s32.totalorder %s18, 3
      %p145 = por %p143, %p144
      %p146 = scmp.ne.s32.totalorder %s138, %s141
      %p147 = scmp.eq.s32.totalorder %s18, 0
      %p148 = por %p146, %p147
      %p149 = scmp.ne.s32.totalorder %s138, %s141
      %p150 = scmp.eq.s32.totalorder %s23, 3
      %p151 = por %p149, %p150
      %p152 = scmp.ne.s32.totalorder %s141, %s142
      %p153 = scmp.eq.s32.totalorder %s23, 0
      %p154 = por %p152, %p153
      %p155 = scmp.ne.s32.totalorder %s141, %s142
      %p156 = scmp.eq.s32.totalorder %s24, 3
      %p157 = por %p155, %p156
      %p159 = scmp.ne.s32.totalorder %s142, %s158
      %p160 = scmp.eq.s32.totalorder %s24, 0
      %p161 = por %p159, %p160
      %p162 = scmp.le.s32.totalorder 1, %s18
      %p163 = scmp.lt.s32.totalorder %s18, 5
      %p164 = pnand %p162, %p163
      %p165 = pneg %p164
      // Predicated region
      $region9: #{tpu_custom_call.1} parent=5 // pred_check
        _
      $region10: #{tpu_custom_call.1} parent=5 // pred_check_branch
        %167 = sbr.rel (%p164) target = $region12
      $region11: #{tpu_custom_call.1} parent=5 // pred_region
        %s168 = ssub.s32 %s18, 1
        // Predicated region
        $region13: #{tpu_custom_call.1} parent=11 // pred_check
          %p169 = pneg %p65
        $region14: #{tpu_custom_call.1} parent=11 // pred_check_branch
          %171 = sbr.rel (%p169) target = $region16
        $region15: #{tpu_custom_call.1} parent=11 // pred_region
          %s173 = ssub.s32 1024, 1024
          %174 = vsyncadd [#allocation6], %s173
          %s175 = sshll.u32 [#allocation5], 4
          %s176 = int_to_ptr.vmem [resolvable:$true] %s175
          %181 = dma.hbm_to_vmem [thread:$0]  %s1, 1024, %s176, [#allocation6], 64, 64, 4
        $region16: #{tpu_custom_call.1} parent=11 // pred_fallthru
          _
        // Predicated region
        $region17: #{tpu_custom_call.1} parent=11 // pred_check
          %p182 = pneg %p86
        $region18: #{tpu_custom_call.1} parent=11 // pred_check_branch
          %184 = sbr.rel (%p182) target = $region20
        $region19: #{tpu_custom_call.1} parent=11 // pred_region
          _
        $region20: #{tpu_custom_call.1} parent=11 // pred_fallthru
          _
        // Predicated region
        $region21: #{tpu_custom_call.1} parent=11 // pred_check
          %p185 = pneg %p107
        $region22: #{tpu_custom_call.1} parent=11 // pred_check_branch
          %187 = sbr.rel (%p185) target = $region24
        $region23: #{tpu_custom_call.1} parent=11 // pred_region
          %s189 = ssub.s32 1024, 1024
          %190 = vsyncadd [#allocation6], %s189
          %s191 = sshll.u32 [#allocation7], 4
          %s192 = int_to_ptr.vmem [resolvable:$true] %s191
          %197 = dma.hbm_to_vmem [thread:$0]  %s3, 1024, %s192, [#allocation6], 64, 64, 4
        $region24: #{tpu_custom_call.1} parent=11 // pred_fallthru
          _
        // Predicated region
        $region25: #{tpu_custom_call.1} parent=11 // pred_check
          %p198 = pneg %p128
        $region26: #{tpu_custom_call.1} parent=11 // pred_check_branch
          %200 = sbr.rel (%p198) target = $region28
        $region27: #{tpu_custom_call.1} parent=11 // pred_region
          _
        $region28: #{tpu_custom_call.1} parent=11 // pred_fallthru
          _
      $region12: #{tpu_custom_call.1} parent=5 // pred_fallthru
        _
      %p201 = scmp.lt.s32.totalorder %s18, 4
      // Predicated region
      $region29: #{tpu_custom_call.1} parent=5 // pred_check
        %p202 = pneg %p201
      $region30: #{tpu_custom_call.1} parent=5 // pred_check_branch
        %204 = sbr.rel (%p202) target = $region32
      $region31: #{tpu_custom_call.1} parent=5 // pred_region
        // Predicated region
        $region33: #{tpu_custom_call.1} parent=31 // pred_check
          %p205 = pneg %p38
        $region34: #{tpu_custom_call.1} parent=31 // pred_check_branch
          %207 = sbr.rel (%p205) target = $region36
        $region35: #{tpu_custom_call.1} parent=31 // pred_region
          %s208 = sand.u32 %s28, 1
          %s209 = scalar_lea.sflag [#allocation3], %s208
          %s210 = sand.u32 %s28, 1
          %s211 = smul.addr %s210, 128
          %s212 = scalar_lea.vmem [#allocation2], %s211
          %s213 = smul.u32 16, %s18
          %s215 = ssub.s32 2048, 2048
          %216 = vsyncadd %s209, %s215
          %s217 = smul.addr %s213, 128
          %s218 = scalar_lea.hbm %s0, %s217
          %s219 = sshll.u32 %s212, 4
          %s220 = int_to_ptr.vmem [resolvable:$true] %s219
          %225 = dma.hbm_to_vmem [thread:$0]  %s218, 2048, %s220, %s209, 128, 128, 8
        $region36: #{tpu_custom_call.1} parent=31 // pred_fallthru
          _
      $region32: #{tpu_custom_call.1} parent=5 // pred_fallthru
        _
      %p226 = scmp.le.s32.totalorder 1, %s18
      %p227 = scmp.lt.s32.totalorder %s18, 5
      %p228 = pnand %p226, %p227
      %p229 = pneg %p228
      // Predicated region
      $region37: #{tpu_custom_call.1} parent=5 // pred_check
        _
      $region38: #{tpu_custom_call.1} parent=5 // pred_check_branch
        %231 = sbr.rel (%p228) target = $region40
      $region39: #{tpu_custom_call.1} parent=5 // pred_region
        %s232 = ssub.s32 %s18, 1
        %s233 = sand.u32 %s31, 1
        %s234 = scalar_lea.sflag [#allocation3], %s233
        %s235 = sand.u32 %s31, 1
        %s236 = smul.addr %s235, 128
        %s237 = scalar_lea.vmem [#allocation2], %s236
        // Predicated region
        $region41: #{tpu_custom_call.1} parent=39 // pred_check
          %p238 = pneg %p44
        $region42: #{tpu_custom_call.1} parent=39 // pred_check_branch
          %240 = sbr.rel (%p238) target = $region44
        $region43: #{tpu_custom_call.1} parent=39 // pred_region
          %241 = dma.done %s234, 2048
        $region44: #{tpu_custom_call.1} parent=39 // pred_fallthru
          _
        // Predicated region
        $region45: #{tpu_custom_call.1} parent=39 // pred_check
          %p242 = pneg %p65
        $region46: #{tpu_custom_call.1} parent=39 // pred_check_branch
          %244 = sbr.rel (%p242) target = $region48
        $region47: #{tpu_custom_call.1} parent=39 // pred_region
          %245 = dma.done [#allocation6], 1024
        $region48: #{tpu_custom_call.1} parent=39 // pred_fallthru
          _
        // Predicated region
        $region49: #{tpu_custom_call.1} parent=39 // pred_check
          %p246 = pneg %p107
        $region50: #{tpu_custom_call.1} parent=39 // pred_check_branch
          %248 = sbr.rel (%p246) target = $region52
        $region51: #{tpu_custom_call.1} parent=39 // pred_region
          %249 = dma.done [#allocation6], 1024
        $region52: #{tpu_custom_call.1} parent=39 // pred_fallthru
          _
        %s250 = sand.u32 %s31, 1
        %s251 = scalar_lea.sflag [#allocation3], %s250
        %s252 = sand.u32 %s31, 1
        %s253 = smul.addr %s252, 128
        %s254 = scalar_lea.vmem [#allocation2], %s253
        %p255 = pneg %p44
        %p256 = pneg %p41
        %p257 = pneg %p65
        %p258 = pneg %p62
        %p259 = pneg %p86
        %p260 = pneg %p83
        %p261 = pneg %p107
        %p262 = pneg %p104
        %p263 = pneg %p128
        %p264 = pneg %p125
        %p265 = pneg %p154
        %p266 = pneg %p151
        %s267 = sand.u32 %s141, 1
        %s268 = scalar_lea.sflag [#allocation4], %s267
        %s269 = sand.u32 %s141, 1
        %s270 = smul.addr %s269, 128
        %s271 = scalar_lea.vmem [#allocation8], %s270
        %s272 = smul.u32 16, %s23
        %s273 = smul.u32 16, %s23
        %v275 = vld [vmem:[#allocation5] sm:$0xf]
        %v276 = vld [vmem:[#allocation5 + $0x4] sm:$0xf]
        %v277 = vld [vmem:[#allocation5 + $0x8] sm:$0xf]
        %v278 = vld [vmem:[#allocation5 + $0xc] sm:$0xf]
        %v279 = vld [vmem:[#allocation5 + $0x10] sm:$0xf]
        %v280 = vld [vmem:[#allocation5 + $0x14] sm:$0xf]
        %v281 = vld [vmem:[#allocation5 + $0x18] sm:$0xf]
        %v282 = vld [vmem:[#allocation5 + $0x1c] sm:$0xf]
        %v283 = vld [vmem:[#allocation5 + $0x20] sm:$0xf]
        %v284 = vld [vmem:[#allocation5 + $0x24] sm:$0xf]
        %v285 = vld [vmem:[#allocation5 + $0x28] sm:$0xf]
        %v286 = vld [vmem:[#allocation5 + $0x2c] sm:$0xf]
        %v287 = vld [vmem:[#allocation5 + $0x30] sm:$0xf]
        %v288 = vld [vmem:[#allocation5 + $0x34] sm:$0xf]
        %v289 = vld [vmem:[#allocation5 + $0x38] sm:$0xf]
        %v290 = vld [vmem:[#allocation5 + $0x3c] sm:$0xf]
        %v291 = vld [vmem:[#allocation7] sm:$0xf]
        %v292 = vld [vmem:[#allocation7 + $0x4] sm:$0xf]
        %v293 = vld [vmem:[#allocation7 + $0x8] sm:$0xf]
        %v294 = vld [vmem:[#allocation7 + $0xc] sm:$0xf]
        %v295 = vld [vmem:[#allocation7 + $0x10] sm:$0xf]
        %v296 = vld [vmem:[#allocation7 + $0x14] sm:$0xf]
        %v297 = vld [vmem:[#allocation7 + $0x18] sm:$0xf]
        %v298 = vld [vmem:[#allocation7 + $0x1c] sm:$0xf]
        %v299 = vld [vmem:[#allocation7 + $0x20] sm:$0xf]
        %v300 = vld [vmem:[#allocation7 + $0x24] sm:$0xf]
        %v301 = vld [vmem:[#allocation7 + $0x28] sm:$0xf]
        %v302 = vld [vmem:[#allocation7 + $0x2c] sm:$0xf]
        %v303 = vld [vmem:[#allocation7 + $0x30] sm:$0xf]
        %v304 = vld [vmem:[#allocation7 + $0x34] sm:$0xf]
        %v305 = vld [vmem:[#allocation7 + $0x38] sm:$0xf]
        %v306 = vld [vmem:[#allocation7 + $0x3c] sm:$0xf]
        %v307 = vld [vmem:[%s2] sm:$0x1]
        %v308 = vld [vmem:[%s4] sm:$0x1]
        %v309 = vld [vmem:[%s237] sm:$0xff]
        %v310 = vld [vmem:[%s237 + $0x8] sm:$0xff]
        %v311 = vld [vmem:[%s237 + $0x10] sm:$0xff]
        %v312 = vld [vmem:[%s237 + $0x18] sm:$0xff]
        %v313 = vld [vmem:[%s237 + $0x20] sm:$0xff]
        %v314 = vld [vmem:[%s237 + $0x28] sm:$0xff]
        %v315 = vld [vmem:[%s237 + $0x30] sm:$0xff]
        %v316 = vld [vmem:[%s237 + $0x38] sm:$0xff]
        %v317 = vld [vmem:[%s237 + $0x40] sm:$0xff]
        %v318 = vld [vmem:[%s237 + $0x48] sm:$0xff]
        %v319 = vld [vmem:[%s237 + $0x50] sm:$0xff]
        %v320 = vld [vmem:[%s237 + $0x58] sm:$0xff]
        %v321 = vld [vmem:[%s237 + $0x60] sm:$0xff]
        %v322 = vld [vmem:[%s237 + $0x68] sm:$0xff]
        %v323 = vld [vmem:[%s237 + $0x70] sm:$0xff]
        %v324 = vld [vmem:[%s237 + $0x78] sm:$0xff]
        loop: start=0, step=1, limit=4
        $region53: #{tpu_custom_call.1} parent=39 // loop_pre_header
          _
        $region54: #{tpu_custom_call.1} parent=39 // loop_header
          %s326 = sphi 0, %s330
          %p327 = scmp.ge.s32.totalorder %s326, 4
          %v331 = vphi %v309, %v1551
          %v332 = vphi %v310, %v1552
          %v333 = vphi %v311, %v1553
          %v334 = vphi %v312, %v1554
          %v335 = vphi %v313, %v1555
          %v336 = vphi %v314, %v1556
          %v337 = vphi %v315, %v1557
          %v338 = vphi %v316, %v1558
          %v339 = vphi %v317, %v1559
          %v340 = vphi %v318, %v1560
          %v341 = vphi %v319, %v1561
          %v342 = vphi %v320, %v1562
          %v343 = vphi %v321, %v1563
          %v344 = vphi %v322, %v1564
          %v345 = vphi %v323, %v1565
          %v346 = vphi %v324, %v1566
        $region55: #{tpu_custom_call.1} parent=39 // loop_header_branch
          %329 = sbr.rel (%p327) target = $region59
        $region56: #{tpu_custom_call.1} parent=39 // loop_body
          %v347 = vpack.c.bf16 %v332, %v331
          %v348 = vpack.c.bf16 %v334, %v333
          %v349 = vpack.c.bf16 %v336, %v335
          %v350 = vpack.c.bf16 %v338, %v337
          %v351 = vpack.c.bf16 %v340, %v339
          %v352 = vpack.c.bf16 %v342, %v341
          %v353 = vpack.c.bf16 %v344, %v343
          %v354 = vpack.c.bf16 %v346, %v345
          %v356 = vlaneseq
          %v357 = vshrl.u32 %v356, 7
          %v358 = vsub.s32 0, %v357
          %v359 = vrot.slane %v307, %v358
          %v377 = vunpack.c.l.b16 %v275
          %v378 = vunpack.c.l.b16 %v276
          %v379 = vunpack.c.l.b16 %v277
          %v380 = vunpack.c.l.b16 %v278
          %v381 = vunpack.c.l.b16 %v279
          %v382 = vunpack.c.l.b16 %v280
          %v383 = vunpack.c.l.b16 %v281
          %v384 = vunpack.c.l.b16 %v282
          %v385 = vunpack.c.l.b16 %v283
          %v386 = vunpack.c.l.b16 %v284
          %v387 = vunpack.c.l.b16 %v285
          %v388 = vunpack.c.l.b16 %v286
          %v389 = vunpack.c.l.b16 %v287
          %v390 = vunpack.c.l.b16 %v288
          %v391 = vunpack.c.l.b16 %v289
          %v392 = vunpack.c.l.b16 %v290
          %v393 = vpack.c.b16 %v378, %v377
          %v394 = vpack.c.b16 %v380, %v379
          %v395 = vpack.c.b16 %v382, %v381
          %v396 = vpack.c.b16 %v384, %v383
          %v397 = vpack.c.b16 %v386, %v385
          %v398 = vpack.c.b16 %v388, %v387
          %v399 = vpack.c.b16 %v390, %v389
          %v400 = vpack.c.b16 %v392, %v391
          %409 = vmatprep.subr.bf16.mxu0 0
          %410 = vmatpush1.bf16.msra.mxu0 %v393
          %411 = vmatprep.subr.bf16.mxu0 0
          %412 = vmatpush1.bf16.msra.mxu0 %v394
          %413 = vmatprep.subr.bf16.mxu0 0
          %414 = vmatpush1.bf16.msra.mxu0 %v395
          %415 = vmatprep.subr.bf16.mxu0 0
          %416 = vmatpush1.bf16.msra.mxu0 %v396
          %417 = vmatprep.subr.bf16.mxu0 0
          %418 = vmatpush1.bf16.msra.mxu0 %v397
          %419 = vmatprep.subr.bf16.mxu0 0
          %420 = vmatpush1.bf16.msra.mxu0 %v398
          %421 = vmatprep.subr.bf16.mxu0 0
          %422 = vmatpush1.bf16.msra.mxu0 %v399
          %423 = vmatprep.subr.bf16.mxu0 0
          %424 = vmatpush1.bf16.msra.mxu0 %v400
          %425 = vmatprep.subr.bf16.mxu0 0
          %426 = vmatpush1.bf16.msra.mxu0 0
          %427 = vmatprep.subr.bf16.mxu0 0
          %428 = vmatpush1.bf16.msra.mxu0 0
          %429 = vmatprep.subr.bf16.mxu0 0
          %430 = vmatpush1.bf16.msra.mxu0 0
          %431 = vmatprep.subr.bf16.mxu0 0
          %432 = vmatpush1.bf16.msra.mxu0 0
          %433 = vmatprep.subr.bf16.mxu0 0
          %434 = vmatpush1.bf16.msra.mxu0 0
          %435 = vmatprep.subr.bf16.mxu0 0
          %436 = vmatpush1.bf16.msra.mxu0 0
          %437 = vmatprep.subr.bf16.mxu0 0
          %438 = vmatpush1.bf16.msra.mxu0 0
          %439 = vmatprep.subr.bf16.mxu0 0
          %440 = vmatpush1.bf16.msra.mxu0 0
          %441 = vmatprep.mubr.bf16.mxu0 0
          %442 = vmatmul.mubr.bf16.gmra.mrb[0].mxu0 %v347
          %v443 = vpop.f32.mrb[0].mxu0
          %v444 = vadd.f32 %v359, %v443
          %v445 = vpop.f32.mrb[0].mxu0
          %v446 = vpop.f32.mrb[0].mxu0
          %v447 = vadd.f32 %v359, %v446
          %v448 = vpop.f32.mrb[0].mxu0
          %449 = vmatprep.mubr.bf16.mxu0 0
          %450 = vmatmul.mubr.bf16.gmra.mrb[0].mxu0 %v348
          %v451 = vpop.f32.mrb[0].mxu0
          %v452 = vadd.f32 %v359, %v451
          %v453 = vpop.f32.mrb[0].mxu0
          %v454 = vpop.f32.mrb[0].mxu0
          %v455 = vadd.f32 %v359, %v454
          %v456 = vpop.f32.mrb[0].mxu0
          %457 = vmatprep.mubr.bf16.mxu0 0
          %458 = vmatmul.mubr.bf16.gmra.mrb[0].mxu0 %v349
          %v459 = vpop.f32.mrb[0].mxu0
          %v460 = vadd.f32 %v359, %v459
          %v461 = vpop.f32.mrb[0].mxu0
          %v462 = vpop.f32.mrb[0].mxu0
          %v463 = vadd.f32 %v359, %v462
          %v464 = vpop.f32.mrb[0].mxu0
          %465 = vmatprep.mubr.bf16.mxu0 0
          %466 = vmatmul.mubr.bf16.gmra.mrb[0].mxu0 %v350
          %v467 = vpop.f32.mrb[0].mxu0
          %v468 = vadd.f32 %v359, %v467
          %v469 = vpop.f32.mrb[0].mxu0
          %v470 = vpop.f32.mrb[0].mxu0
          %v471 = vadd.f32 %v359, %v470
          %v472 = vpop.f32.mrb[0].mxu0
          %473 = vmatprep.mubr.bf16.mxu0 0
          %474 = vmatmul.mubr.bf16.gmra.mrb[0].mxu0 %v351
          %v475 = vpop.f32.mrb[0].mxu0
          %v476 = vadd.f32 %v359, %v475
          %v477 = vpop.f32.mrb[0].mxu0
          %v478 = vpop.f32.mrb[0].mxu0
          %v479 = vadd.f32 %v359, %v478
          %v480 = vpop.f32.mrb[0].mxu0
          %481 = vmatprep.mubr.bf16.mxu0 0
          %482 = vmatmul.mubr.bf16.gmra.mrb[0].mxu0 %v352
          %v483 = vpop.f32.mrb[0].mxu0
          %v484 = vadd.f32 %v359, %v483
          %v485 = vpop.f32.mrb[0].mxu0
          %v486 = vpop.f32.mrb[0].mxu0
          %v487 = vadd.f32 %v359, %v486
          %v488 = vpop.f32.mrb[0].mxu0
          %489 = vmatprep.mubr.bf16.mxu0 0
          %490 = vmatmul.mubr.bf16.gmra.mrb[0].mxu0 %v353
          %v491 = vpop.f32.mrb[0].mxu0
          %v492 = vadd.f32 %v359, %v491
          %v493 = vpop.f32.mrb[0].mxu0
          %v494 = vpop.f32.mrb[0].mxu0
          %v495 = vadd.f32 %v359, %v494
          %v496 = vpop.f32.mrb[0].mxu0
          %497 = vmatprep.mubr.bf16.mxu0 0
          %498 = vmatmul.mubr.bf16.gmra.mrb[0].mxu0 %v354
          %v499 = vpop.f32.mrb[0].mxu0
          %v500 = vadd.f32 %v359, %v499
          %v501 = vpop.f32.mrb[0].mxu0
          %v502 = vpop.f32.mrb[0].mxu0
          %v503 = vadd.f32 %v359, %v502
          %v504 = vpop.f32.mrb[0].mxu0
          %505 = vdwg.mxu0
          %v506 = vtanh.pop %v444
          %v507 = vtanh.pop %v447
          %v508 = vtanh.pop %v452
          %v509 = vtanh.pop %v455
          %v510 = vtanh.pop %v460
          %v511 = vtanh.pop %v463
          %v512 = vtanh.pop %v468
          %v513 = vtanh.pop %v471
          %v514 = vtanh.pop %v476
          %v515 = vtanh.pop %v479
          %v516 = vtanh.pop %v484
          %v517 = vtanh.pop %v487
          %v518 = vtanh.pop %v492
          %v519 = vtanh.pop %v495
          %v520 = vtanh.pop %v500
          %v521 = vtanh.pop %v503
          %v522 = vpack.c.bf16 %v507, %v506
          %v523 = vpack.c.bf16 %v509, %v508
          %v524 = vpack.c.bf16 %v511, %v510
          %v525 = vpack.c.bf16 %v513, %v512
          %v526 = vpack.c.bf16 %v515, %v514
          %v527 = vpack.c.bf16 %v517, %v516
          %v528 = vpack.c.bf16 %v519, %v518
          %v529 = vpack.c.bf16 %v521, %v520
          %v531 = vlaneseq
          %v532 = vshrl.u32 %v531, 7
          %v533 = vsub.s32 0, %v532
          %v534 = vrot.slane %v308, %v533
          %v552 = vunpack.c.l.b16 %v291
          %v553 = vunpack.c.l.b16 %v292
          %v554 = vunpack.c.l.b16 %v293
          %v555 = vunpack.c.l.b16 %v294
          %v556 = vunpack.c.l.b16 %v295
          %v557 = vunpack.c.l.b16 %v296
          %v558 = vunpack.c.l.b16 %v297
          %v559 = vunpack.c.l.b16 %v298
          %v560 = vunpack.c.l.b16 %v299
          %v561 = vunpack.c.l.b16 %v300
          %v562 = vunpack.c.l.b16 %v301
          %v563 = vunpack.c.l.b16 %v302
          %v564 = vunpack.c.l.b16 %v303
          %v565 = vunpack.c.l.b16 %v304
          %v566 = vunpack.c.l.b16 %v305
          %v567 = vunpack.c.l.b16 %v306
          %v568 = vpack.c.b16 %v553, %v552
          %v569 = vpack.c.b16 %v555, %v554
          %v570 = vpack.c.b16 %v557, %v556
          %v571 = vpack.c.b16 %v559, %v558
          %v572 = vpack.c.b16 %v561, %v560
          %v573 = vpack.c.b16 %v563, %v562
          %v574 = vpack.c.b16 %v565, %v564
          %v575 = vpack.c.b16 %v567, %v566
          %584 = vmatprep.subr.bf16.mxu0 0
          %585 = vmatpush1.bf16.msra.mxu0 %v568
          %586 = vmatprep.subr.bf16.mxu0 0
          %587 = vmatpush1.bf16.msra.mxu0 %v569
          %588 = vmatprep.subr.bf16.mxu0 0
          %589 = vmatpush1.bf16.msra.mxu0 %v570
          %590 = vmatprep.subr.bf16.mxu0 0
          %591 = vmatpush1.bf16.msra.mxu0 %v571
          %592 = vmatprep.subr.bf16.mxu0 0
          %593 = vmatpush1.bf16.msra.mxu0 %v572
          %594 = vmatprep.subr.bf16.mxu0 0
          %595 = vmatpush1.bf16.msra.mxu0 %v573
          %596 = vmatprep.subr.bf16.mxu0 0
          %597 = vmatpush1.bf16.msra.mxu0 %v574
          %598 = vmatprep.subr.bf16.mxu0 0
          %599 = vmatpush1.bf16.msra.mxu0 %v575
          %600 = vmatprep.subr.bf16.mxu0 0
          %601 = vmatpush1.bf16.msra.mxu0 0
          %602 = vmatprep.subr.bf16.mxu0 0
          %603 = vmatpush1.bf16.msra.mxu0 0
          %604 = vmatprep.subr.bf16.mxu0 0
          %605 = vmatpush1.bf16.msra.mxu0 0
          %606 = vmatprep.subr.bf16.mxu0 0
          %607 = vmatpush1.bf16.msra.mxu0 0
          %608 = vmatprep.subr.bf16.mxu0 0
          %609 = vmatpush1.bf16.msra.mxu0 0
          %610 = vmatprep.subr.bf16.mxu0 0
          %611 = vmatpush1.bf16.msra.mxu0 0
          %612 = vmatprep.subr.bf16.mxu0 0
          %613 = vmatpush1.bf16.msra.mxu0 0
          %614 = vmatprep.subr.bf16.mxu0 0
          %615 = vmatpush1.bf16.msra.mxu0 0
          %616 = vmatprep.mubr.bf16.mxu0 0
          %617 = vmatmul.mubr.bf16.gmra.mrb[0].mxu0 %v522
          %v618 = vpop.f32.mrb[0].mxu0
          %v619 = vadd.f32 %v534, %v618
          %v620 = vpop.f32.mrb[0].mxu0
          %v621 = vpop.f32.mrb[0].mxu0
          %v622 = vadd.f32 %v534, %v621
          %v623 = vpop.f32.mrb[0].mxu0
          %624 = vmatprep.mubr.bf16.mxu0 0
          %625 = vmatmul.mubr.bf16.gmra.mrb[0].mxu0 %v523
          %v626 = vpop.f32.mrb[0].mxu0
          %v627 = vadd.f32 %v534, %v626
          %v628 = vpop.f32.mrb[0].mxu0
          %v629 = vpop.f32.mrb[0].mxu0
          %v630 = vadd.f32 %v534, %v629
          %v631 = vpop.f32.mrb[0].mxu0
          %632 = vmatprep.mubr.bf16.mxu0 0
          %633 = vmatmul.mubr.bf16.gmra.mrb[0].mxu0 %v524
          %v634 = vpop.f32.mrb[0].mxu0
          %v635 = vadd.f32 %v534, %v634
          %v636 = vpop.f32.mrb[0].mxu0
          %v637 = vpop.f32.mrb[0].mxu0
          %v638 = vadd.f32 %v534, %v637
          %v639 = vpop.f32.mrb[0].mxu0
          %640 = vmatprep.mubr.bf16.mxu0 0
          %641 = vmatmul.mubr.bf16.gmra.mrb[0].mxu0 %v525
          %v642 = vpop.f32.mrb[0].mxu0
          %v643 = vadd.f32 %v534, %v642
          %v644 = vpop.f32.mrb[0].mxu0
          %v645 = vpop.f32.mrb[0].mxu0
          %v646 = vadd.f32 %v534, %v645
          %v647 = vpop.f32.mrb[0].mxu0
          %648 = vmatprep.mubr.bf16.mxu0 0
          %649 = vmatmul.mubr.bf16.gmra.mrb[0].mxu0 %v526
          %v650 = vpop.f32.mrb[0].mxu0
          %v651 = vadd.f32 %v534, %v650
          %v652 = vpop.f32.mrb[0].mxu0
          %v653 = vpop.f32.mrb[0].mxu0
          %v654 = vadd.f32 %v534, %v653
          %v655 = vpop.f32.mrb[0].mxu0
          %656 = vmatprep.mubr.bf16.mxu0 0
          %657 = vmatmul.mubr.bf16.gmra.mrb[0].mxu0 %v527
          %v658 = vpop.f32.mrb[0].mxu0
          %v659 = vadd.f32 %v534, %v658
          %v660 = vpop.f32.mrb[0].mxu0
          %v661 = vpop.f32.mrb[0].mxu0
          %v662 = vadd.f32 %v534, %v661
          %v663 = vpop.f32.mrb[0].mxu0
          %664 = vmatprep.mubr.bf16.mxu0 0
          %665 = vmatmul.mubr.bf16.gmra.mrb[0].mxu0 %v528
          %v666 = vpop.f32.mrb[0].mxu0
          %v667 = vadd.f32 %v534, %v666
          %v668 = vpop.f32.mrb[0].mxu0
          %v669 = vpop.f32.mrb[0].mxu0
          %v670 = vadd.f32 %v534, %v669
          %v671 = vpop.f32.mrb[0].mxu0
          %672 = vmatprep.mubr.bf16.mxu0 0
          %673 = vmatmul.mubr.bf16.gmra.mrb[0].mxu0 %v529
          %v674 = vpop.f32.mrb[0].mxu0
          %v675 = vadd.f32 %v534, %v674
          %v676 = vpop.f32.mrb[0].mxu0
          %v677 = vpop.f32.mrb[0].mxu0
          %v678 = vadd.f32 %v534, %v677
          %v679 = vpop.f32.mrb[0].mxu0
          %680 = vdwg.mxu0
          %v681 = vmul.f32 %v619, 0.125
          %v682 = vmul.f32 %v622, 0.125
          %v683 = vmul.f32 %v627, 0.125
          %v684 = vmul.f32 %v630, 0.125
          %v685 = vmul.f32 %v635, 0.125
          %v686 = vmul.f32 %v638, 0.125
          %v687 = vmul.f32 %v643, 0.125
          %v688 = vmul.f32 %v646, 0.125
          %v689 = vmul.f32 %v651, 0.125
          %v690 = vmul.f32 %v654, 0.125
          %v691 = vmul.f32 %v659, 0.125
          %v692 = vmul.f32 %v662, 0.125
          %v693 = vmul.f32 %v667, 0.125
          %v694 = vmul.f32 %v670, 0.125
          %v695 = vmul.f32 %v675, 0.125
          %v696 = vmul.f32 %v678, 0.125
          %v697 = vadd.f32 %v331, %v681
          %v698 = vadd.f32 %v332, %v682
          %v699 = vadd.f32 %v333, %v683
          %v700 = vadd.f32 %v334, %v684
          %v701 = vadd.f32 %v335, %v685
          %v702 = vadd.f32 %v336, %v686
          %v703 = vadd.f32 %v337, %v687
          %v704 = vadd.f32 %v338, %v688
          %v705 = vadd.f32 %v339, %v689
          %v706 = vadd.f32 %v340, %v690
          %v707 = vadd.f32 %v341, %v691
          %v708 = vadd.f32 %v342, %v692
          %v709 = vadd.f32 %v343, %v693
          %v710 = vadd.f32 %v344, %v694
          %v711 = vadd.f32 %v345, %v695
          %v712 = vadd.f32 %v346, %v696
          %v713 = vpack.c.bf16 %v698, %v697
          %v714 = vpack.c.bf16 %v700, %v699
          %v715 = vpack.c.bf16 %v702, %v701
          %v716 = vpack.c.bf16 %v704, %v703
          %v717 = vpack.c.bf16 %v706, %v705
          %v718 = vpack.c.bf16 %v708, %v707
          %v719 = vpack.c.bf16 %v710, %v709
          %v720 = vpack.c.bf16 %v712, %v711
          %721 = vmatprep.subr.bf16.mxu0 0
          %722 = vmatpush1.bf16.msra.mxu0 %v393
          %723 = vmatprep.subr.bf16.mxu0 0
          %724 = vmatpush1.bf16.msra.mxu0 %v394
          %725 = vmatprep.subr.bf16.mxu0 0
          %726 = vmatpush1.bf16.msra.mxu0 %v395
          %727 = vmatprep.subr.bf16.mxu0 0
          %728 = vmatpush1.bf16.msra.mxu0 %v396
          %729 = vmatprep.subr.bf16.mxu0 0
          %730 = vmatpush1.bf16.msra.mxu0 %v397
          %731 = vmatprep.subr.bf16.mxu0 0
          %732 = vmatpush1.bf16.msra.mxu0 %v398
          %733 = vmatprep.subr.bf16.mxu0 0
          %734 = vmatpush1.bf16.msra.mxu0 %v399
          %735 = vmatprep.subr.bf16.mxu0 0
          %736 = vmatpush1.bf16.msra.mxu0 %v400
          %737 = vmatprep.subr.bf16.mxu0 0
          %738 = vmatpush1.bf16.msra.mxu0 0
          %739 = vmatprep.subr.bf16.mxu0 0
          %740 = vmatpush1.bf16.msra.mxu0 0
          %741 = vmatprep.subr.bf16.mxu0 0
          %742 = vmatpush1.bf16.msra.mxu0 0
          %743 = vmatprep.subr.bf16.mxu0 0
          %744 = vmatpush1.bf16.msra.mxu0 0
          %745 = vmatprep.subr.bf16.mxu0 0
          %746 = vmatpush1.bf16.msra.mxu0 0
          %747 = vmatprep.subr.bf16.mxu0 0
          %748 = vmatpush1.bf16.msra.mxu0 0
          %749 = vmatprep.subr.bf16.mxu0 0
          %750 = vmatpush1.bf16.msra.mxu0 0
          %751 = vmatprep.subr.bf16.mxu0 0
          %752 = vmatpush1.bf16.msra.mxu0 0
          %753 = vmatprep.mubr.bf16.mxu0 0
          %754 = vmatmul.mubr.bf16.gmra.mrb[0].mxu0 %v713
          %v755 = vpop.f32.mrb[0].mxu0
          %v756 = vadd.f32 %v359, %v755
          %v757 = vpop.f32.mrb[0].mxu0
          %v758 = vpop.f32.mrb[0].mxu0
          %v759 = vadd.f32 %v359, %v758
          %v760 = vpop.f32.mrb[0].mxu0
          %761 = vmatprep.mubr.bf16.mxu0 0
          %762 = vmatmul.mubr.bf16.gmra.mrb[0].mxu0 %v714
          %v763 = vpop.f32.mrb[0].mxu0
          %v764 = vadd.f32 %v359, %v763
          %v765 = vpop.f32.mrb[0].mxu0
          %v766 = vpop.f32.mrb[0].mxu0
          %v767 = vadd.f32 %v359, %v766
          %v768 = vpop.f32.mrb[0].mxu0
          %769 = vmatprep.mubr.bf16.mxu0 0
          %770 = vmatmul.mubr.bf16.gmra.mrb[0].mxu0 %v715
          %v771 = vpop.f32.mrb[0].mxu0
          %v772 = vadd.f32 %v359, %v771
          %v773 = vpop.f32.mrb[0].mxu0
          %v774 = vpop.f32.mrb[0].mxu0
          %v775 = vadd.f32 %v359, %v774
          %v776 = vpop.f32.mrb[0].mxu0
          %777 = vmatprep.mubr.bf16.mxu0 0
          %778 = vmatmul.mubr.bf16.gmra.mrb[0].mxu0 %v716
          %v779 = vpop.f32.mrb[0].mxu0
          %v780 = vadd.f32 %v359, %v779
          %v781 = vpop.f32.mrb[0].mxu0
          %v782 = vpop.f32.mrb[0].mxu0
          %v783 = vadd.f32 %v359, %v782
          %v784 = vpop.f32.mrb[0].mxu0
          %785 = vmatprep.mubr.bf16.mxu0 0
          %786 = vmatmul.mubr.bf16.gmra.mrb[0].mxu0 %v717
          %v787 = vpop.f32.mrb[0].mxu0
          %v788 = vadd.f32 %v359, %v787
          %v789 = vpop.f32.mrb[0].mxu0
          %v790 = vpop.f32.mrb[0].mxu0
          %v791 = vadd.f32 %v359, %v790
          %v792 = vpop.f32.mrb[0].mxu0
          %793 = vmatprep.mubr.bf16.mxu0 0
          %794 = vmatmul.mubr.bf16.gmra.mrb[0].mxu0 %v718
          %v795 = vpop.f32.mrb[0].mxu0
          %v796 = vadd.f32 %v359, %v795
          %v797 = vpop.f32.mrb[0].mxu0
          %v798 = vpop.f32.mrb[0].mxu0
          %v799 = vadd.f32 %v359, %v798
          %v800 = vpop.f32.mrb[0].mxu0
          %801 = vmatprep.mubr.bf16.mxu0 0
          %802 = vmatmul.mubr.bf16.gmra.mrb[0].mxu0 %v719
          %v803 = vpop.f32.mrb[0].mxu0
          %v804 = vadd.f32 %v359, %v803
          %v805 = vpop.f32.mrb[0].mxu0
          %v806 = vpop.f32.mrb[0].mxu0
          %v807 = vadd.f32 %v359, %v806
          %v808 = vpop.f32.mrb[0].mxu0
          %809 = vmatprep.mubr.bf16.mxu0 0
          %810 = vmatmul.mubr.bf16.gmra.mrb[0].mxu0 %v720
          %v811 = vpop.f32.mrb[0].mxu0
          %v812 = vadd.f32 %v359, %v811
          %v813 = vpop.f32.mrb[0].mxu0
          %v814 = vpop.f32.mrb[0].mxu0
          %v815 = vadd.f32 %v359, %v814
          %v816 = vpop.f32.mrb[0].mxu0
          %817 = vdwg.mxu0
          %v818 = vtanh.pop %v756
          %v819 = vtanh.pop %v759
          %v820 = vtanh.pop %v764
          %v821 = vtanh.pop %v767
          %v822 = vtanh.pop %v772
          %v823 = vtanh.pop %v775
          %v824 = vtanh.pop %v780
          %v825 = vtanh.pop %v783
          %v826 = vtanh.pop %v788
          %v827 = vtanh.pop %v791
          %v828 = vtanh.pop %v796
          %v829 = vtanh.pop %v799
          %v830 = vtanh.pop %v804
          %v831 = vtanh.pop %v807
          %v832 = vtanh.pop %v812
          %v833 = vtanh.pop %v815
          %v834 = vpack.c.bf16 %v819, %v818
          %v835 = vpack.c.bf16 %v821, %v820
          %v836 = vpack.c.bf16 %v823, %v822
          %v837 = vpack.c.bf16 %v825, %v824
          %v838 = vpack.c.bf16 %v827, %v826
          %v839 = vpack.c.bf16 %v829, %v828
          %v840 = vpack.c.bf16 %v831, %v830
          %v841 = vpack.c.bf16 %v833, %v832
          %842 = vmatprep.subr.bf16.mxu0 0
          %843 = vmatpush1.bf16.msra.mxu0 %v568
          %844 = vmatprep.subr.bf16.mxu0 0
          %845 = vmatpush1.bf16.msra.mxu0 %v569
          %846 = vmatprep.subr.bf16.mxu0 0
          %847 = vmatpush1.bf16.msra.mxu0 %v570
          %848 = vmatprep.subr.bf16.mxu0 0
          %849 = vmatpush1.bf16.msra.mxu0 %v571
          %850 = vmatprep.subr.bf16.mxu0 0
          %851 = vmatpush1.bf16.msra.mxu0 %v572
          %852 = vmatprep.subr.bf16.mxu0 0
          %853 = vmatpush1.bf16.msra.mxu0 %v573
          %854 = vmatprep.subr.bf16.mxu0 0
          %855 = vmatpush1.bf16.msra.mxu0 %v574
          %856 = vmatprep.subr.bf16.mxu0 0
          %857 = vmatpush1.bf16.msra.mxu0 %v575
          %858 = vmatprep.subr.bf16.mxu0 0
          %859 = vmatpush1.bf16.msra.mxu0 0
          %860 = vmatprep.subr.bf16.mxu0 0
          %861 = vmatpush1.bf16.msra.mxu0 0
          %862 = vmatprep.subr.bf16.mxu0 0
          %863 = vmatpush1.bf16.msra.mxu0 0
          %864 = vmatprep.subr.bf16.mxu0 0
          %865 = vmatpush1.bf16.msra.mxu0 0
          %866 = vmatprep.subr.bf16.mxu0 0
          %867 = vmatpush1.bf16.msra.mxu0 0
          %868 = vmatprep.subr.bf16.mxu0 0
          %869 = vmatpush1.bf16.msra.mxu0 0
          %870 = vmatprep.subr.bf16.mxu0 0
          %871 = vmatpush1.bf16.msra.mxu0 0
          %872 = vmatprep.subr.bf16.mxu0 0
          %873 = vmatpush1.bf16.msra.mxu0 0
          %874 = vmatprep.mubr.bf16.mxu0 0
          %875 = vmatmul.mubr.bf16.gmra.mrb[0].mxu0 %v834
          %v876 = vpop.f32.mrb[0].mxu0
          %v877 = vadd.f32 %v534, %v876
          %v878 = vpop.f32.mrb[0].mxu0
          %v879 = vpop.f32.mrb[0].mxu0
          %v880 = vadd.f32 %v534, %v879
          %v881 = vpop.f32.mrb[0].mxu0
          %882 = vmatprep.mubr.bf16.mxu0 0
          %883 = vmatmul.mubr.bf16.gmra.mrb[0].mxu0 %v835
          %v884 = vpop.f32.mrb[0].mxu0
          %v885 = vadd.f32 %v534, %v884
          %v886 = vpop.f32.mrb[0].mxu0
          %v887 = vpop.f32.mrb[0].mxu0
          %v888 = vadd.f32 %v534, %v887
          %v889 = vpop.f32.mrb[0].mxu0
          %890 = vmatprep.mubr.bf16.mxu0 0
          %891 = vmatmul.mubr.bf16.gmra.mrb[0].mxu0 %v836
          %v892 = vpop.f32.mrb[0].mxu0
          %v893 = vadd.f32 %v534, %v892
          %v894 = vpop.f32.mrb[0].mxu0
          %v895 = vpop.f32.mrb[0].mxu0
          %v896 = vadd.f32 %v534, %v895
          %v897 = vpop.f32.mrb[0].mxu0
          %898 = vmatprep.mubr.bf16.mxu0 0
          %899 = vmatmul.mubr.bf16.gmra.mrb[0].mxu0 %v837
          %v900 = vpop.f32.mrb[0].mxu0
          %v901 = vadd.f32 %v534, %v900
          %v902 = vpop.f32.mrb[0].mxu0
          %v903 = vpop.f32.mrb[0].mxu0
          %v904 = vadd.f32 %v534, %v903
          %v905 = vpop.f32.mrb[0].mxu0
          %906 = vmatprep.mubr.bf16.mxu0 0
          %907 = vmatmul.mubr.bf16.gmra.mrb[0].mxu0 %v838
          %v908 = vpop.f32.mrb[0].mxu0
          %v909 = vadd.f32 %v534, %v908
          %v910 = vpop.f32.mrb[0].mxu0
          %v911 = vpop.f32.mrb[0].mxu0
          %v912 = vadd.f32 %v534, %v911
          %v913 = vpop.f32.mrb[0].mxu0
          %914 = vmatprep.mubr.bf16.mxu0 0
          %915 = vmatmul.mubr.bf16.gmra.mrb[0].mxu0 %v839
          %v916 = vpop.f32.mrb[0].mxu0
          %v917 = vadd.f32 %v534, %v916
          %v918 = vpop.f32.mrb[0].mxu0
          %v919 = vpop.f32.mrb[0].mxu0
          %v920 = vadd.f32 %v534, %v919
          %v921 = vpop.f32.mrb[0].mxu0
          %922 = vmatprep.mubr.bf16.mxu0 0
          %923 = vmatmul.mubr.bf16.gmra.mrb[0].mxu0 %v840
          %v924 = vpop.f32.mrb[0].mxu0
          %v925 = vadd.f32 %v534, %v924
          %v926 = vpop.f32.mrb[0].mxu0
          %v927 = vpop.f32.mrb[0].mxu0
          %v928 = vadd.f32 %v534, %v927
          %v929 = vpop.f32.mrb[0].mxu0
          %930 = vmatprep.mubr.bf16.mxu0 0
          %931 = vmatmul.mubr.bf16.gmra.mrb[0].mxu0 %v841
          %v932 = vpop.f32.mrb[0].mxu0
          %v933 = vadd.f32 %v534, %v932
          %v934 = vpop.f32.mrb[0].mxu0
          %v935 = vpop.f32.mrb[0].mxu0
          %v936 = vadd.f32 %v534, %v935
          %v937 = vpop.f32.mrb[0].mxu0
          %938 = vdwg.mxu0
          %v939 = vmul.f32 %v877, 2.0
          %v940 = vmul.f32 %v880, 2.0
          %v941 = vmul.f32 %v885, 2.0
          %v942 = vmul.f32 %v888, 2.0
          %v943 = vmul.f32 %v893, 2.0
          %v944 = vmul.f32 %v896, 2.0
          %v945 = vmul.f32 %v901, 2.0
          %v946 = vmul.f32 %v904, 2.0
          %v947 = vmul.f32 %v909, 2.0
          %v948 = vmul.f32 %v912, 2.0
          %v949 = vmul.f32 %v917, 2.0
          %v950 = vmul.f32 %v920, 2.0
          %v951 = vmul.f32 %v925, 2.0
          %v952 = vmul.f32 %v928, 2.0
          %v953 = vmul.f32 %v933, 2.0
          %v954 = vmul.f32 %v936, 2.0
          %v955 = vadd.f32 %v619, %v939
          %v956 = vadd.f32 %v622, %v940
          %v957 = vadd.f32 %v627, %v941
          %v958 = vadd.f32 %v630, %v942
          %v959 = vadd.f32 %v635, %v943
          %v960 = vadd.f32 %v638, %v944
          %v961 = vadd.f32 %v643, %v945
          %v962 = vadd.f32 %v646, %v946
          %v963 = vadd.f32 %v651, %v947
          %v964 = vadd.f32 %v654, %v948
          %v965 = vadd.f32 %v659, %v949
          %v966 = vadd.f32 %v662, %v950
          %v967 = vadd.f32 %v667, %v951
          %v968 = vadd.f32 %v670, %v952
          %v969 = vadd.f32 %v675, %v953
          %v970 = vadd.f32 %v678, %v954
          %v971 = vmul.f32 %v877, 0.125
          %v972 = vmul.f32 %v880, 0.125
          %v973 = vmul.f32 %v885, 0.125
          %v974 = vmul.f32 %v888, 0.125
          %v975 = vmul.f32 %v893, 0.125
          %v976 = vmul.f32 %v896, 0.125
          %v977 = vmul.f32 %v901, 0.125
          %v978 = vmul.f32 %v904, 0.125
          %v979 = vmul.f32 %v909, 0.125
          %v980 = vmul.f32 %v912, 0.125
          %v981 = vmul.f32 %v917, 0.125
          %v982 = vmul.f32 %v920, 0.125
          %v983 = vmul.f32 %v925, 0.125
          %v984 = vmul.f32 %v928, 0.125
          %v985 = vmul.f32 %v933, 0.125
          %v986 = vmul.f32 %v936, 0.125
          %v987 = vadd.f32 %v331, %v971
          %v988 = vadd.f32 %v332, %v972
          %v989 = vadd.f32 %v333, %v973
          %v990 = vadd.f32 %v334, %v974
          %v991 = vadd.f32 %v335, %v975
          %v992 = vadd.f32 %v336, %v976
          %v993 = vadd.f32 %v337, %v977
          %v994 = vadd.f32 %v338, %v978
          %v995 = vadd.f32 %v339, %v979
          %v996 = vadd.f32 %v340, %v980
          %v997 = vadd.f32 %v341, %v981
          %v998 = vadd.f32 %v342, %v982
          %v999 = vadd.f32 %v343, %v983
          %v1000 = vadd.f32 %v344, %v984
          %v1001 = vadd.f32 %v345, %v985
          %v1002 = vadd.f32 %v346, %v986
          %v1003 = vpack.c.bf16 %v988, %v987
          %v1004 = vpack.c.bf16 %v990, %v989
          %v1005 = vpack.c.bf16 %v992, %v991
          %v1006 = vpack.c.bf16 %v994, %v993
          %v1007 = vpack.c.bf16 %v996, %v995
          %v1008 = vpack.c.bf16 %v998, %v997
          %v1009 = vpack.c.bf16 %v1000, %v999
          %v1010 = vpack.c.bf16 %v1002, %v1001
          %1011 = vmatprep.subr.bf16.mxu0 0
          %1012 = vmatpush1.bf16.msra.mxu0 %v393
          %1013 = vmatprep.subr.bf16.mxu0 0
          %1014 = vmatpush1.bf16.msra.mxu0 %v394
          %1015 = vmatprep.subr.bf16.mxu0 0
          %1016 = vmatpush1.bf16.msra.mxu0 %v395
          %1017 = vmatprep.subr.bf16.mxu0 0
          %1018 = vmatpush1.bf16.msra.mxu0 %v396
          %1019 = vmatprep.subr.bf16.mxu0 0
          %1020 = vmatpush1.bf16.msra.mxu0 %v397
          %1021 = vmatprep.subr.bf16.mxu0 0
          %1022 = vmatpush1.bf16.msra.mxu0 %v398
          %1023 = vmatprep.subr.bf16.mxu0 0
          %1024 = vmatpush1.bf16.msra.mxu0 %v399
          %1025 = vmatprep.subr.bf16.mxu0 0
          %1026 = vmatpush1.bf16.msra.mxu0 %v400
          %1027 = vmatprep.subr.bf16.mxu0 0
          %1028 = vmatpush1.bf16.msra.mxu0 0
          %1029 = vmatprep.subr.bf16.mxu0 0
          %1030 = vmatpush1.bf16.msra.mxu0 0
          %1031 = vmatprep.subr.bf16.mxu0 0
          %1032 = vmatpush1.bf16.msra.mxu0 0
          %1033 = vmatprep.subr.bf16.mxu0 0
          %1034 = vmatpush1.bf16.msra.mxu0 0
          %1035 = vmatprep.subr.bf16.mxu0 0
          %1036 = vmatpush1.bf16.msra.mxu0 0
          %1037 = vmatprep.subr.bf16.mxu0 0
          %1038 = vmatpush1.bf16.msra.mxu0 0
          %1039 = vmatprep.subr.bf16.mxu0 0
          %1040 = vmatpush1.bf16.msra.mxu0 0
          %1041 = vmatprep.subr.bf16.mxu0 0
          %1042 = vmatpush1.bf16.msra.mxu0 0
          %1043 = vmatprep.mubr.bf16.mxu0 0
          %1044 = vmatmul.mubr.bf16.gmra.mrb[0].mxu0 %v1003
          %v1045 = vpop.f32.mrb[0].mxu0
          %v1046 = vadd.f32 %v359, %v1045
          %v1047 = vpop.f32.mrb[0].mxu0
          %v1048 = vpop.f32.mrb[0].mxu0
          %v1049 = vadd.f32 %v359, %v1048
          %v1050 = vpop.f32.mrb[0].mxu0
          %1051 = vmatprep.mubr.bf16.mxu0 0
          %1052 = vmatmul.mubr.bf16.gmra.mrb[0].mxu0 %v1004
          %v1053 = vpop.f32.mrb[0].mxu0
          %v1054 = vadd.f32 %v359, %v1053
          %v1055 = vpop.f32.mrb[0].mxu0
          %v1056 = vpop.f32.mrb[0].mxu0
          %v1057 = vadd.f32 %v359, %v1056
          %v1058 = vpop.f32.mrb[0].mxu0
          %1059 = vmatprep.mubr.bf16.mxu0 0
          %1060 = vmatmul.mubr.bf16.gmra.mrb[0].mxu0 %v1005
          %v1061 = vpop.f32.mrb[0].mxu0
          %v1062 = vadd.f32 %v359, %v1061
          %v1063 = vpop.f32.mrb[0].mxu0
          %v1064 = vpop.f32.mrb[0].mxu0
          %v1065 = vadd.f32 %v359, %v1064
          %v1066 = vpop.f32.mrb[0].mxu0
          %1067 = vmatprep.mubr.bf16.mxu0 0
          %1068 = vmatmul.mubr.bf16.gmra.mrb[0].mxu0 %v1006
          %v1069 = vpop.f32.mrb[0].mxu0
          %v1070 = vadd.f32 %v359, %v1069
          %v1071 = vpop.f32.mrb[0].mxu0
          %v1072 = vpop.f32.mrb[0].mxu0
          %v1073 = vadd.f32 %v359, %v1072
          %v1074 = vpop.f32.mrb[0].mxu0
          %1075 = vmatprep.mubr.bf16.mxu0 0
          %1076 = vmatmul.mubr.bf16.gmra.mrb[0].mxu0 %v1007
          %v1077 = vpop.f32.mrb[0].mxu0
          %v1078 = vadd.f32 %v359, %v1077
          %v1079 = vpop.f32.mrb[0].mxu0
          %v1080 = vpop.f32.mrb[0].mxu0
          %v1081 = vadd.f32 %v359, %v1080
          %v1082 = vpop.f32.mrb[0].mxu0
          %1083 = vmatprep.mubr.bf16.mxu0 0
          %1084 = vmatmul.mubr.bf16.gmra.mrb[0].mxu0 %v1008
          %v1085 = vpop.f32.mrb[0].mxu0
          %v1086 = vadd.f32 %v359, %v1085
          %v1087 = vpop.f32.mrb[0].mxu0
          %v1088 = vpop.f32.mrb[0].mxu0
          %v1089 = vadd.f32 %v359, %v1088
          %v1090 = vpop.f32.mrb[0].mxu0
          %1091 = vmatprep.mubr.bf16.mxu0 0
          %1092 = vmatmul.mubr.bf16.gmra.mrb[0].mxu0 %v1009
          %v1093 = vpop.f32.mrb[0].mxu0
          %v1094 = vadd.f32 %v359, %v1093
          %v1095 = vpop.f32.mrb[0].mxu0
          %v1096 = vpop.f32.mrb[0].mxu0
          %v1097 = vadd.f32 %v359, %v1096
          %v1098 = vpop.f32.mrb[0].mxu0
          %1099 = vmatprep.mubr.bf16.mxu0 0
          %1100 = vmatmul.mubr.bf16.gmra.mrb[0].mxu0 %v1010
          %v1101 = vpop.f32.mrb[0].mxu0
          %v1102 = vadd.f32 %v359, %v1101
          %v1103 = vpop.f32.mrb[0].mxu0
          %v1104 = vpop.f32.mrb[0].mxu0
          %v1105 = vadd.f32 %v359, %v1104
          %v1106 = vpop.f32.mrb[0].mxu0
          %1107 = vdwg.mxu0
          %v1108 = vtanh.pop %v1046
          %v1109 = vtanh.pop %v1049
          %v1110 = vtanh.pop %v1054
          %v1111 = vtanh.pop %v1057
          %v1112 = vtanh.pop %v1062
          %v1113 = vtanh.pop %v1065
          %v1114 = vtanh.pop %v1070
          %v1115 = vtanh.pop %v1073
          %v1116 = vtanh.pop %v1078
          %v1117 = vtanh.pop %v1081
          %v1118 = vtanh.pop %v1086
          %v1119 = vtanh.pop %v1089
          %v1120 = vtanh.pop %v1094
          %v1121 = vtanh.pop %v1097
          %v1122 = vtanh.pop %v1102
          %v1123 = vtanh.pop %v1105
          %v1124 = vpack.c.bf16 %v1109, %v1108
          %v1125 = vpack.c.bf16 %v1111, %v1110
          %v1126 = vpack.c.bf16 %v1113, %v1112
          %v1127 = vpack.c.bf16 %v1115, %v1114
          %v1128 = vpack.c.bf16 %v1117, %v1116
          %v1129 = vpack.c.bf16 %v1119, %v1118
          %v1130 = vpack.c.bf16 %v1121, %v1120
          %v1131 = vpack.c.bf16 %v1123, %v1122
          %1132 = vmatprep.subr.bf16.mxu0 0
          %1133 = vmatpush1.bf16.msra.mxu0 %v568
          %1134 = vmatprep.subr.bf16.mxu0 0
          %1135 = vmatpush1.bf16.msra.mxu0 %v569
          %1136 = vmatprep.subr.bf16.mxu0 0
          %1137 = vmatpush1.bf16.msra.mxu0 %v570
          %1138 = vmatprep.subr.bf16.mxu0 0
          %1139 = vmatpush1.bf16.msra.mxu0 %v571
          %1140 = vmatprep.subr.bf16.mxu0 0
          %1141 = vmatpush1.bf16.msra.mxu0 %v572
          %1142 = vmatprep.subr.bf16.mxu0 0
          %1143 = vmatpush1.bf16.msra.mxu0 %v573
          %1144 = vmatprep.subr.bf16.mxu0 0
          %1145 = vmatpush1.bf16.msra.mxu0 %v574
          %1146 = vmatprep.subr.bf16.mxu0 0
          %1147 = vmatpush1.bf16.msra.mxu0 %v575
          %1148 = vmatprep.subr.bf16.mxu0 0
          %1149 = vmatpush1.bf16.msra.mxu0 0
          %1150 = vmatprep.subr.bf16.mxu0 0
          %1151 = vmatpush1.bf16.msra.mxu0 0
          %1152 = vmatprep.subr.bf16.mxu0 0
          %1153 = vmatpush1.bf16.msra.mxu0 0
          %1154 = vmatprep.subr.bf16.mxu0 0
          %1155 = vmatpush1.bf16.msra.mxu0 0
          %1156 = vmatprep.subr.bf16.mxu0 0
          %1157 = vmatpush1.bf16.msra.mxu0 0
          %1158 = vmatprep.subr.bf16.mxu0 0
          %1159 = vmatpush1.bf16.msra.mxu0 0
          %1160 = vmatprep.subr.bf16.mxu0 0
          %1161 = vmatpush1.bf16.msra.mxu0 0
          %1162 = vmatprep.subr.bf16.mxu0 0
          %1163 = vmatpush1.bf16.msra.mxu0 0
          %1164 = vmatprep.mubr.bf16.mxu0 0
          %1165 = vmatmul.mubr.bf16.gmra.mrb[0].mxu0 %v1124
          %v1166 = vpop.f32.mrb[0].mxu0
          %v1167 = vadd.f32 %v534, %v1166
          %v1168 = vpop.f32.mrb[0].mxu0
          %v1169 = vpop.f32.mrb[0].mxu0
          %v1170 = vadd.f32 %v534, %v1169
          %v1171 = vpop.f32.mrb[0].mxu0
          %1172 = vmatprep.mubr.bf16.mxu0 0
          %1173 = vmatmul.mubr.bf16.gmra.mrb[0].mxu0 %v1125
          %v1174 = vpop.f32.mrb[0].mxu0
          %v1175 = vadd.f32 %v534, %v1174
          %v1176 = vpop.f32.mrb[0].mxu0
          %v1177 = vpop.f32.mrb[0].mxu0
          %v1178 = vadd.f32 %v534, %v1177
          %v1179 = vpop.f32.mrb[0].mxu0
          %1180 = vmatprep.mubr.bf16.mxu0 0
          %1181 = vmatmul.mubr.bf16.gmra.mrb[0].mxu0 %v1126
          %v1182 = vpop.f32.mrb[0].mxu0
          %v1183 = vadd.f32 %v534, %v1182
          %v1184 = vpop.f32.mrb[0].mxu0
          %v1185 = vpop.f32.mrb[0].mxu0
          %v1186 = vadd.f32 %v534, %v1185
          %v1187 = vpop.f32.mrb[0].mxu0
          %1188 = vmatprep.mubr.bf16.mxu0 0
          %1189 = vmatmul.mubr.bf16.gmra.mrb[0].mxu0 %v1127
          %v1190 = vpop.f32.mrb[0].mxu0
          %v1191 = vadd.f32 %v534, %v1190
          %v1192 = vpop.f32.mrb[0].mxu0
          %v1193 = vpop.f32.mrb[0].mxu0
          %v1194 = vadd.f32 %v534, %v1193
          %v1195 = vpop.f32.mrb[0].mxu0
          %1196 = vmatprep.mubr.bf16.mxu0 0
          %1197 = vmatmul.mubr.bf16.gmra.mrb[0].mxu0 %v1128
          %v1198 = vpop.f32.mrb[0].mxu0
          %v1199 = vadd.f32 %v534, %v1198
          %v1200 = vpop.f32.mrb[0].mxu0
          %v1201 = vpop.f32.mrb[0].mxu0
          %v1202 = vadd.f32 %v534, %v1201
          %v1203 = vpop.f32.mrb[0].mxu0
          %1204 = vmatprep.mubr.bf16.mxu0 0
          %1205 = vmatmul.mubr.bf16.gmra.mrb[0].mxu0 %v1129
          %v1206 = vpop.f32.mrb[0].mxu0
          %v1207 = vadd.f32 %v534, %v1206
          %v1208 = vpop.f32.mrb[0].mxu0
          %v1209 = vpop.f32.mrb[0].mxu0
          %v1210 = vadd.f32 %v534, %v1209
          %v1211 = vpop.f32.mrb[0].mxu0
          %1212 = vmatprep.mubr.bf16.mxu0 0
          %1213 = vmatmul.mubr.bf16.gmra.mrb[0].mxu0 %v1130
          %v1214 = vpop.f32.mrb[0].mxu0
          %v1215 = vadd.f32 %v534, %v1214
          %v1216 = vpop.f32.mrb[0].mxu0
          %v1217 = vpop.f32.mrb[0].mxu0
          %v1218 = vadd.f32 %v534, %v1217
          %v1219 = vpop.f32.mrb[0].mxu0
          %1220 = vmatprep.mubr.bf16.mxu0 0
          %1221 = vmatmul.mubr.bf16.gmra.mrb[0].mxu0 %v1131
          %v1222 = vpop.f32.mrb[0].mxu0
          %v1223 = vadd.f32 %v534, %v1222
          %v1224 = vpop.f32.mrb[0].mxu0
          %v1225 = vpop.f32.mrb[0].mxu0
          %v1226 = vadd.f32 %v534, %v1225
          %v1227 = vpop.f32.mrb[0].mxu0
          %1228 = vdwg.mxu0
          %v1229 = vmul.f32 %v1167, 2.0
          %v1230 = vmul.f32 %v1170, 2.0
          %v1231 = vmul.f32 %v1175, 2.0
          %v1232 = vmul.f32 %v1178, 2.0
          %v1233 = vmul.f32 %v1183, 2.0
          %v1234 = vmul.f32 %v1186, 2.0
          %v1235 = vmul.f32 %v1191, 2.0
          %v1236 = vmul.f32 %v1194, 2.0
          %v1237 = vmul.f32 %v1199, 2.0
          %v1238 = vmul.f32 %v1202, 2.0
          %v1239 = vmul.f32 %v1207, 2.0
          %v1240 = vmul.f32 %v1210, 2.0
          %v1241 = vmul.f32 %v1215, 2.0
          %v1242 = vmul.f32 %v1218, 2.0
          %v1243 = vmul.f32 %v1223, 2.0
          %v1244 = vmul.f32 %v1226, 2.0
          %v1245 = vadd.f32 %v955, %v1229
          %v1246 = vadd.f32 %v956, %v1230
          %v1247 = vadd.f32 %v957, %v1231
          %v1248 = vadd.f32 %v958, %v1232
          %v1249 = vadd.f32 %v959, %v1233
          %v1250 = vadd.f32 %v960, %v1234
          %v1251 = vadd.f32 %v961, %v1235
          %v1252 = vadd.f32 %v962, %v1236
          %v1253 = vadd.f32 %v963, %v1237
          %v1254 = vadd.f32 %v964, %v1238
          %v1255 = vadd.f32 %v965, %v1239
          %v1256 = vadd.f32 %v966, %v1240
          %v1257 = vadd.f32 %v967, %v1241
          %v1258 = vadd.f32 %v968, %v1242
          %v1259 = vadd.f32 %v969, %v1243
          %v1260 = vadd.f32 %v970, %v1244
          %v1261 = vmul.f32 %v1167, 0.25
          %v1262 = vmul.f32 %v1170, 0.25
          %v1263 = vmul.f32 %v1175, 0.25
          %v1264 = vmul.f32 %v1178, 0.25
          %v1265 = vmul.f32 %v1183, 0.25
          %v1266 = vmul.f32 %v1186, 0.25
          %v1267 = vmul.f32 %v1191, 0.25
          %v1268 = vmul.f32 %v1194, 0.25
          %v1269 = vmul.f32 %v1199, 0.25
          %v1270 = vmul.f32 %v1202, 0.25
          %v1271 = vmul.f32 %v1207, 0.25
          %v1272 = vmul.f32 %v1210, 0.25
          %v1273 = vmul.f32 %v1215, 0.25
          %v1274 = vmul.f32 %v1218, 0.25
          %v1275 = vmul.f32 %v1223, 0.25
          %v1276 = vmul.f32 %v1226, 0.25
          %v1277 = vadd.f32 %v331, %v1261
          %v1278 = vadd.f32 %v332, %v1262
          %v1279 = vadd.f32 %v333, %v1263
          %v1280 = vadd.f32 %v334, %v1264
          %v1281 = vadd.f32 %v335, %v1265
          %v1282 = vadd.f32 %v336, %v1266
          %v1283 = vadd.f32 %v337, %v1267
          %v1284 = vadd.f32 %v338, %v1268
          %v1285 = vadd.f32 %v339, %v1269
          %v1286 = vadd.f32 %v340, %v1270
          %v1287 = vadd.f32 %v341, %v1271
          %v1288 = vadd.f32 %v342, %v1272
          %v1289 = vadd.f32 %v343, %v1273
          %v1290 = vadd.f32 %v344, %v1274
          %v1291 = vadd.f32 %v345, %v1275
          %v1292 = vadd.f32 %v346, %v1276
          %v1293 = vpack.c.bf16 %v1278, %v1277
          %v1294 = vpack.c.bf16 %v1280, %v1279
          %v1295 = vpack.c.bf16 %v1282, %v1281
          %v1296 = vpack.c.bf16 %v1284, %v1283
          %v1297 = vpack.c.bf16 %v1286, %v1285
          %v1298 = vpack.c.bf16 %v1288, %v1287
          %v1299 = vpack.c.bf16 %v1290, %v1289
          %v1300 = vpack.c.bf16 %v1292, %v1291
          %1301 = vmatprep.subr.bf16.mxu0 0
          %1302 = vmatpush1.bf16.msra.mxu0 %v393
          %1303 = vmatprep.subr.bf16.mxu0 0
          %1304 = vmatpush1.bf16.msra.mxu0 %v394
          %1305 = vmatprep.subr.bf16.mxu0 0
          %1306 = vmatpush1.bf16.msra.mxu0 %v395
          %1307 = vmatprep.subr.bf16.mxu0 0
          %1308 = vmatpush1.bf16.msra.mxu0 %v396
          %1309 = vmatprep.subr.bf16.mxu0 0
          %1310 = vmatpush1.bf16.msra.mxu0 %v397
          %1311 = vmatprep.subr.bf16.mxu0 0
          %1312 = vmatpush1.bf16.msra.mxu0 %v398
          %1313 = vmatprep.subr.bf16.mxu0 0
          %1314 = vmatpush1.bf16.msra.mxu0 %v399
          %1315 = vmatprep.subr.bf16.mxu0 0
          %1316 = vmatpush1.bf16.msra.mxu0 %v400
          %1317 = vmatprep.subr.bf16.mxu0 0
          %1318 = vmatpush1.bf16.msra.mxu0 0
          %1319 = vmatprep.subr.bf16.mxu0 0
          %1320 = vmatpush1.bf16.msra.mxu0 0
          %1321 = vmatprep.subr.bf16.mxu0 0
          %1322 = vmatpush1.bf16.msra.mxu0 0
          %1323 = vmatprep.subr.bf16.mxu0 0
          %1324 = vmatpush1.bf16.msra.mxu0 0
          %1325 = vmatprep.subr.bf16.mxu0 0
          %1326 = vmatpush1.bf16.msra.mxu0 0
          %1327 = vmatprep.subr.bf16.mxu0 0
          %1328 = vmatpush1.bf16.msra.mxu0 0
          %1329 = vmatprep.subr.bf16.mxu0 0
          %1330 = vmatpush1.bf16.msra.mxu0 0
          %1331 = vmatprep.subr.bf16.mxu0 0
          %1332 = vmatpush1.bf16.msra.mxu0 0
          %1333 = vmatprep.mubr.bf16.mxu0 0
          %1334 = vmatmul.mubr.bf16.gmra.mrb[0].mxu0 %v1293
          %v1335 = vpop.f32.mrb[0].mxu0
          %v1336 = vadd.f32 %v359, %v1335
          %v1337 = vpop.f32.mrb[0].mxu0
          %v1338 = vpop.f32.mrb[0].mxu0
          %v1339 = vadd.f32 %v359, %v1338
          %v1340 = vpop.f32.mrb[0].mxu0
          %1341 = vmatprep.mubr.bf16.mxu0 0
          %1342 = vmatmul.mubr.bf16.gmra.mrb[0].mxu0 %v1294
          %v1343 = vpop.f32.mrb[0].mxu0
          %v1344 = vadd.f32 %v359, %v1343
          %v1345 = vpop.f32.mrb[0].mxu0
          %v1346 = vpop.f32.mrb[0].mxu0
          %v1347 = vadd.f32 %v359, %v1346
          %v1348 = vpop.f32.mrb[0].mxu0
          %1349 = vmatprep.mubr.bf16.mxu0 0
          %1350 = vmatmul.mubr.bf16.gmra.mrb[0].mxu0 %v1295
          %v1351 = vpop.f32.mrb[0].mxu0
          %v1352 = vadd.f32 %v359, %v1351
          %v1353 = vpop.f32.mrb[0].mxu0
          %v1354 = vpop.f32.mrb[0].mxu0
          %v1355 = vadd.f32 %v359, %v1354
          %v1356 = vpop.f32.mrb[0].mxu0
          %1357 = vmatprep.mubr.bf16.mxu0 0
          %1358 = vmatmul.mubr.bf16.gmra.mrb[0].mxu0 %v1296
          %v1359 = vpop.f32.mrb[0].mxu0
          %v1360 = vadd.f32 %v359, %v1359
          %v1361 = vpop.f32.mrb[0].mxu0
          %v1362 = vpop.f32.mrb[0].mxu0
          %v1363 = vadd.f32 %v359, %v1362
          %v1364 = vpop.f32.mrb[0].mxu0
          %1365 = vmatprep.mubr.bf16.mxu0 0
          %1366 = vmatmul.mubr.bf16.gmra.mrb[0].mxu0 %v1297
          %v1367 = vpop.f32.mrb[0].mxu0
          %v1368 = vadd.f32 %v359, %v1367
          %v1369 = vpop.f32.mrb[0].mxu0
          %v1370 = vpop.f32.mrb[0].mxu0
          %v1371 = vadd.f32 %v359, %v1370
          %v1372 = vpop.f32.mrb[0].mxu0
          %1373 = vmatprep.mubr.bf16.mxu0 0
          %1374 = vmatmul.mubr.bf16.gmra.mrb[0].mxu0 %v1298
          %v1375 = vpop.f32.mrb[0].mxu0
          %v1376 = vadd.f32 %v359, %v1375
          %v1377 = vpop.f32.mrb[0].mxu0
          %v1378 = vpop.f32.mrb[0].mxu0
          %v1379 = vadd.f32 %v359, %v1378
          %v1380 = vpop.f32.mrb[0].mxu0
          %1381 = vmatprep.mubr.bf16.mxu0 0
          %1382 = vmatmul.mubr.bf16.gmra.mrb[0].mxu0 %v1299
          %v1383 = vpop.f32.mrb[0].mxu0
          %v1384 = vadd.f32 %v359, %v1383
          %v1385 = vpop.f32.mrb[0].mxu0
          %v1386 = vpop.f32.mrb[0].mxu0
          %v1387 = vadd.f32 %v359, %v1386
          %v1388 = vpop.f32.mrb[0].mxu0
          %1389 = vmatprep.mubr.bf16.mxu0 0
          %1390 = vmatmul.mubr.bf16.gmra.mrb[0].mxu0 %v1300
          %v1391 = vpop.f32.mrb[0].mxu0
          %v1392 = vadd.f32 %v359, %v1391
          %v1393 = vpop.f32.mrb[0].mxu0
          %v1394 = vpop.f32.mrb[0].mxu0
          %v1395 = vadd.f32 %v359, %v1394
          %v1396 = vpop.f32.mrb[0].mxu0
          %1397 = vdwg.mxu0
          %v1398 = vtanh.pop %v1336
          %v1399 = vtanh.pop %v1339
          %v1400 = vtanh.pop %v1344
          %v1401 = vtanh.pop %v1347
          %v1402 = vtanh.pop %v1352
          %v1403 = vtanh.pop %v1355
          %v1404 = vtanh.pop %v1360
          %v1405 = vtanh.pop %v1363
          %v1406 = vtanh.pop %v1368
          %v1407 = vtanh.pop %v1371
          %v1408 = vtanh.pop %v1376
          %v1409 = vtanh.pop %v1379
          %v1410 = vtanh.pop %v1384
          %v1411 = vtanh.pop %v1387
          %v1412 = vtanh.pop %v1392
          %v1413 = vtanh.pop %v1395
          %v1414 = vpack.c.bf16 %v1399, %v1398
          %v1415 = vpack.c.bf16 %v1401, %v1400
          %v1416 = vpack.c.bf16 %v1403, %v1402
          %v1417 = vpack.c.bf16 %v1405, %v1404
          %v1418 = vpack.c.bf16 %v1407, %v1406
          %v1419 = vpack.c.bf16 %v1409, %v1408
          %v1420 = vpack.c.bf16 %v1411, %v1410
          %v1421 = vpack.c.bf16 %v1413, %v1412
          %1422 = vmatprep.subr.bf16.mxu0 0
          %1423 = vmatpush1.bf16.msra.mxu0 %v568
          %1424 = vmatprep.subr.bf16.mxu0 0
          %1425 = vmatpush1.bf16.msra.mxu0 %v569
          %1426 = vmatprep.subr.bf16.mxu0 0
          %1427 = vmatpush1.bf16.msra.mxu0 %v570
          %1428 = vmatprep.subr.bf16.mxu0 0
          %1429 = vmatpush1.bf16.msra.mxu0 %v571
          %1430 = vmatprep.subr.bf16.mxu0 0
          %1431 = vmatpush1.bf16.msra.mxu0 %v572
          %1432 = vmatprep.subr.bf16.mxu0 0
          %1433 = vmatpush1.bf16.msra.mxu0 %v573
          %1434 = vmatprep.subr.bf16.mxu0 0
          %1435 = vmatpush1.bf16.msra.mxu0 %v574
          %1436 = vmatprep.subr.bf16.mxu0 0
          %1437 = vmatpush1.bf16.msra.mxu0 %v575
          %1438 = vmatprep.subr.bf16.mxu0 0
          %1439 = vmatpush1.bf16.msra.mxu0 0
          %1440 = vmatprep.subr.bf16.mxu0 0
          %1441 = vmatpush1.bf16.msra.mxu0 0
          %1442 = vmatprep.subr.bf16.mxu0 0
          %1443 = vmatpush1.bf16.msra.mxu0 0
          %1444 = vmatprep.subr.bf16.mxu0 0
          %1445 = vmatpush1.bf16.msra.mxu0 0
          %1446 = vmatprep.subr.bf16.mxu0 0
          %1447 = vmatpush1.bf16.msra.mxu0 0
          %1448 = vmatprep.subr.bf16.mxu0 0
          %1449 = vmatpush1.bf16.msra.mxu0 0
          %1450 = vmatprep.subr.bf16.mxu0 0
          %1451 = vmatpush1.bf16.msra.mxu0 0
          %1452 = vmatprep.subr.bf16.mxu0 0
          %1453 = vmatpush1.bf16.msra.mxu0 0
          %1454 = vmatprep.mubr.bf16.mxu0 0
          %1455 = vmatmul.mubr.bf16.gmra.mrb[0].mxu0 %v1414
          %v1456 = vpop.f32.mrb[0].mxu0
          %v1457 = vadd.f32 %v534, %v1456
          %v1458 = vpop.f32.mrb[0].mxu0
          %v1459 = vpop.f32.mrb[0].mxu0
          %v1460 = vadd.f32 %v534, %v1459
          %v1461 = vpop.f32.mrb[0].mxu0
          %1462 = vmatprep.mubr.bf16.mxu0 0
          %1463 = vmatmul.mubr.bf16.gmra.mrb[0].mxu0 %v1415
          %v1464 = vpop.f32.mrb[0].mxu0
          %v1465 = vadd.f32 %v534, %v1464
          %v1466 = vpop.f32.mrb[0].mxu0
          %v1467 = vpop.f32.mrb[0].mxu0
          %v1468 = vadd.f32 %v534, %v1467
          %v1469 = vpop.f32.mrb[0].mxu0
          %1470 = vmatprep.mubr.bf16.mxu0 0
          %1471 = vmatmul.mubr.bf16.gmra.mrb[0].mxu0 %v1416
          %v1472 = vpop.f32.mrb[0].mxu0
          %v1473 = vadd.f32 %v534, %v1472
          %v1474 = vpop.f32.mrb[0].mxu0
          %v1475 = vpop.f32.mrb[0].mxu0
          %v1476 = vadd.f32 %v534, %v1475
          %v1477 = vpop.f32.mrb[0].mxu0
          %1478 = vmatprep.mubr.bf16.mxu0 0
          %1479 = vmatmul.mubr.bf16.gmra.mrb[0].mxu0 %v1417
          %v1480 = vpop.f32.mrb[0].mxu0
          %v1481 = vadd.f32 %v534, %v1480
          %v1482 = vpop.f32.mrb[0].mxu0
          %v1483 = vpop.f32.mrb[0].mxu0
          %v1484 = vadd.f32 %v534, %v1483
          %v1485 = vpop.f32.mrb[0].mxu0
          %1486 = vmatprep.mubr.bf16.mxu0 0
          %1487 = vmatmul.mubr.bf16.gmra.mrb[0].mxu0 %v1418
          %v1488 = vpop.f32.mrb[0].mxu0
          %v1489 = vadd.f32 %v534, %v1488
          %v1490 = vpop.f32.mrb[0].mxu0
          %v1491 = vpop.f32.mrb[0].mxu0
          %v1492 = vadd.f32 %v534, %v1491
          %v1493 = vpop.f32.mrb[0].mxu0
          %1494 = vmatprep.mubr.bf16.mxu0 0
          %1495 = vmatmul.mubr.bf16.gmra.mrb[0].mxu0 %v1419
          %v1496 = vpop.f32.mrb[0].mxu0
          %v1497 = vadd.f32 %v534, %v1496
          %v1498 = vpop.f32.mrb[0].mxu0
          %v1499 = vpop.f32.mrb[0].mxu0
          %v1500 = vadd.f32 %v534, %v1499
          %v1501 = vpop.f32.mrb[0].mxu0
          %1502 = vmatprep.mubr.bf16.mxu0 0
          %1503 = vmatmul.mubr.bf16.gmra.mrb[0].mxu0 %v1420
          %v1504 = vpop.f32.mrb[0].mxu0
          %v1505 = vadd.f32 %v534, %v1504
          %v1506 = vpop.f32.mrb[0].mxu0
          %v1507 = vpop.f32.mrb[0].mxu0
          %v1508 = vadd.f32 %v534, %v1507
          %v1509 = vpop.f32.mrb[0].mxu0
          %1510 = vmatprep.mubr.bf16.mxu0 0
          %1511 = vmatmul.mubr.bf16.gmra.mrb[0].mxu0 %v1421
          %v1512 = vpop.f32.mrb[0].mxu0
          %v1513 = vadd.f32 %v534, %v1512
          %v1514 = vpop.f32.mrb[0].mxu0
          %v1515 = vpop.f32.mrb[0].mxu0
          %v1516 = vadd.f32 %v534, %v1515
          %v1517 = vpop.f32.mrb[0].mxu0
          %1518 = vdwg.mxu0
          %v1519 = vadd.f32 %v1245, %v1457
          %v1520 = vadd.f32 %v1246, %v1460
          %v1521 = vadd.f32 %v1247, %v1465
          %v1522 = vadd.f32 %v1248, %v1468
          %v1523 = vadd.f32 %v1249, %v1473
          %v1524 = vadd.f32 %v1250, %v1476
          %v1525 = vadd.f32 %v1251, %v1481
          %v1526 = vadd.f32 %v1252, %v1484
          %v1527 = vadd.f32 %v1253, %v1489
          %v1528 = vadd.f32 %v1254, %v1492
          %v1529 = vadd.f32 %v1255, %v1497
          %v1530 = vadd.f32 %v1256, %v1500
          %v1531 = vadd.f32 %v1257, %v1505
          %v1532 = vadd.f32 %v1258, %v1508
          %v1533 = vadd.f32 %v1259, %v1513
          %v1534 = vadd.f32 %v1260, %v1516
          %v1535 = vmul.f32 %v1519, 0.041666668
          %v1536 = vmul.f32 %v1520, 0.041666668
          %v1537 = vmul.f32 %v1521, 0.041666668
          %v1538 = vmul.f32 %v1522, 0.041666668
          %v1539 = vmul.f32 %v1523, 0.041666668
          %v1540 = vmul.f32 %v1524, 0.041666668
          %v1541 = vmul.f32 %v1525, 0.041666668
          %v1542 = vmul.f32 %v1526, 0.041666668
          %v1543 = vmul.f32 %v1527, 0.041666668
          %v1544 = vmul.f32 %v1528, 0.041666668
          %v1545 = vmul.f32 %v1529, 0.041666668
          %v1546 = vmul.f32 %v1530, 0.041666668
          %v1547 = vmul.f32 %v1531, 0.041666668
          %v1548 = vmul.f32 %v1532, 0.041666668
          %v1549 = vmul.f32 %v1533, 0.041666668
          %v1550 = vmul.f32 %v1534, 0.041666668
          %v1551 = vadd.f32 %v331, %v1535
          %v1552 = vadd.f32 %v332, %v1536
          %v1553 = vadd.f32 %v333, %v1537
          %v1554 = vadd.f32 %v334, %v1538
          %v1555 = vadd.f32 %v335, %v1539
          %v1556 = vadd.f32 %v336, %v1540
          %v1557 = vadd.f32 %v337, %v1541
          %v1558 = vadd.f32 %v338, %v1542
          %v1559 = vadd.f32 %v339, %v1543
          %v1560 = vadd.f32 %v340, %v1544
          %v1561 = vadd.f32 %v341, %v1545
          %v1562 = vadd.f32 %v342, %v1546
          %v1563 = vadd.f32 %v343, %v1547
          %v1564 = vadd.f32 %v344, %v1548
          %v1565 = vadd.f32 %v345, %v1549
          %v1566 = vadd.f32 %v346, %v1550
        $region57: #{tpu_custom_call.1} parent=39 // loop_footer
          %s330 = sadd.s32 1, %s326
        $region58: #{tpu_custom_call.1} parent=39 // loop_footer_branch
          %325 = sbr.rel target = $region54
        $region59: #{tpu_custom_call.1} parent=39 // loop_exit
          _
        %1567 = vst [vmem:[%s271] sm:$0xff] %v331
        %1568 = vst [vmem:[%s271 + $0x8] sm:$0xff] %v332
        %1569 = vst [vmem:[%s271 + $0x10] sm:$0xff] %v333
        %1570 = vst [vmem:[%s271 + $0x18] sm:$0xff] %v334
        %1571 = vst [vmem:[%s271 + $0x20] sm:$0xff] %v335
        %1572 = vst [vmem:[%s271 + $0x28] sm:$0xff] %v336
        %1573 = vst [vmem:[%s271 + $0x30] sm:$0xff] %v337
        %1574 = vst [vmem:[%s271 + $0x38] sm:$0xff] %v338
        %1575 = vst [vmem:[%s271 + $0x40] sm:$0xff] %v339
        %1576 = vst [vmem:[%s271 + $0x48] sm:$0xff] %v340
        %1577 = vst [vmem:[%s271 + $0x50] sm:$0xff] %v341
        %1578 = vst [vmem:[%s271 + $0x58] sm:$0xff] %v342
        %1579 = vst [vmem:[%s271 + $0x60] sm:$0xff] %v343
        %1580 = vst [vmem:[%s271 + $0x68] sm:$0xff] %v344
        %1581 = vst [vmem:[%s271 + $0x70] sm:$0xff] %v345
        %1582 = vst [vmem:[%s271 + $0x78] sm:$0xff] %v346
        %s1583 = sand.u32 %s141, 1
        %s1584 = scalar_lea.sflag [#allocation4], %s1583
        %s1585 = sand.u32 %s141, 1
        %s1586 = smul.addr %s1585, 128
        %s1587 = scalar_lea.vmem [#allocation8], %s1586
        // Predicated region
        $region60: #{tpu_custom_call.1} parent=39 // pred_check
          %p1588 = pneg %p151
        $region61: #{tpu_custom_call.1} parent=39 // pred_check_branch
          %1590 = sbr.rel (%p1588) target = $region63
        $region62: #{tpu_custom_call.1} parent=39 // pred_region
          %s1591 = smul.u32 16, %s23
          %s1593 = ssub.s32 2048, 2048
          %1594 = vsyncadd %s1584, %s1593
          %s1595 = smul.addr %s1591, 128
          %s1596 = scalar_lea.hbm %s5, %s1595
          %s1597 = sshll.u32 %s1587, 4
          %s1598 = int_to_ptr.vmem [resolvable:$true] %s1597
          %1603 = dma.vmem_to_hbm [thread:$0]  %s1598, 2048, %s1596, %s1584, 128, 128, 8
        $region63: #{tpu_custom_call.1} parent=39 // pred_fallthru
          _
      $region40: #{tpu_custom_call.1} parent=5 // pred_fallthru
        _
      %p1604 = scmp.le.s32.totalorder 2, %s18
      // Predicated region
      $region64: #{tpu_custom_call.1} parent=5 // pred_check
        %p1605 = pneg %p1604
      $region65: #{tpu_custom_call.1} parent=5 // pred_check_branch
        %1607 = sbr.rel (%p1605) target = $region67
      $region66: #{tpu_custom_call.1} parent=5 // pred_region
        %s1608 = ssub.s32 %s18, 2
        // Predicated region
        $region68: #{tpu_custom_call.1} parent=66 // pred_check
          %p1609 = pneg %p157
        $region69: #{tpu_custom_call.1} parent=66 // pred_check_branch
          %1611 = sbr.rel (%p1609) target = $region71
        $region70: #{tpu_custom_call.1} parent=66 // pred_region
          %s1612 = sand.u32 %s142, 1
          %s1613 = scalar_lea.sflag [#allocation4], %s1612
          %s1614 = sand.u32 %s142, 1
          %s1615 = smul.addr %s1614, 128
          %s1616 = scalar_lea.vmem [#allocation8], %s1615
          %1617 = dma.done %s1613, 2048
        $region71: #{tpu_custom_call.1} parent=66 // pred_fallthru
          _
      $region67: #{tpu_custom_call.1} parent=5 // pred_fallthru
        _
    $region6: #{tpu_custom_call.1} parent=1 // loop_footer
      %s22 = sadd.s32 1, %s18
    $region7: #{tpu_custom_call.1} parent=1 // loop_footer_branch
      %17 = sbr.rel target = $region3
    $region8: #{tpu_custom_call.1} parent=1 // loop_exit
      _
    %1618 = vsyncpa [#allocation3], 1
    %s1619 = scalar_lea.sflag [#allocation3], 1
    %1620 = vsyncpa %s1619, 1
    %1621 = vsyncpa [#allocation6], 1
    %1622 = vsyncpa [#allocation4], 1
    %s1623 = scalar_lea.sflag [#allocation4], 1
    %1624 = vsyncpa %s1623, 1

</llo_original>
